<compile_context>
chip_gen: v7x
topology: tpu7x:2x2x1
jax: 0.10.0
libtpu: 0.0.40
codegen_flags: <defaults>
</compile_context>

<pallas_src>
import functools

import jax
import jax.numpy as jnp
from jax.experimental import pallas as pl
from jax.experimental.pallas import tpu as pltpu


def _round_up(x: int, m: int) -> int:
    return ((x + m - 1) // m) * m


def _patch_embed_kernel(x_ref, w_ref, b_ref, o_ref, *, bb, C, H, Hp, Wp, P):
    # x_ref: (bb, C*H, Wp, P)  raw image rows; x_ref[bl, c*H + hp*P + i, wp, j]
    #                          == x[b0+bl, c, hp*P + i, wp*P + j]
    # w_ref: (K, E_pad)        bf16 projection, K rows ordered (c, i, j) (resident)
    # b_ref: (1, E_pad)        f32 bias (resident)
    # o_ref: (bb*Hp*Wp, E_pad) output rows ordered (bl, hp, wp)
    #
    # Space-to-depth in VMEM: only static ref slices + concatenates (no general
    # transposes/reshapes), so it lowers cleanly in Mosaic.  The XLU/VPU work is
    # tiny next to the per-step matmul.
    rows = []
    for bl in range(bb):
        for hp in range(Hp):
            parts = []
            for c in range(C):
                base = c * H + hp * P
                for i in range(P):
                    parts.append(x_ref[bl, base + i])        # (Wp, P)
            rows.append(jnp.concatenate(parts, axis=1))      # (Wp, C*P*P)
    lhs = jnp.concatenate(rows, axis=0)                       # (bb*N, K) f32
    lhs = lhs.astype(w_ref.dtype)                              # bf16 for the MXU
    acc = jnp.dot(lhs, w_ref[...], preferred_element_type=jnp.float32)
    o_ref[...] = (acc + b_ref[...]).astype(o_ref.dtype)


@functools.partial(jax.jit,
                   static_argnames=("patch_size", "block_rows", "out_dtype"))
def patch_embedding(x, weight, bias, patch_size, *, block_rows=1024,
                    out_dtype=jnp.bfloat16):
    """x: (B, C, H, W); weight: (E, C, P, P); bias: (E,). Returns (B, N, E)."""
    B, C, H, W = x.shape
    E = weight.shape[0]
    P = patch_size
    assert H % P == 0 and W % P == 0, "spatial dims must be divisible by patch size"
    Hp, Wp = H // P, W // P
    N = Hp * Wp
    K = C * P * P
    M = B * N

    compute_dtype = jnp.bfloat16

    # Metadata-only view (row-major split of W into (Wp, P)); no HBM pass.
    x4 = x.reshape(B, C * H, Wp, P)

    # Weight rows in (c, i, j) order -> matches the in-kernel concat order.
    w_mat = weight.reshape(E, K).T.astype(compute_dtype)      # (K, E) bf16
    b_row = bias.reshape(1, E).astype(jnp.float32)             # (1, E) f32

    # Lane-dense output: pad E to a multiple of 128 (unmasked full-vreg stores).
    E_pad = _round_up(E, 128)
    if E_pad != E:
        w_mat = jnp.pad(w_mat, ((0, 0), (0, E_pad - E)))
        b_row = jnp.pad(b_row, ((0, 0), (0, E_pad - E)))

    # Images per grid step: keep ~block_rows LHS rows per matmul while the
    # output row block stays sublane-aligned.  bb | B, so M needs no padding.
    bb = 1
    for d in range(B, 0, -1):
        if B % d == 0 and d * N <= max(block_rows, N) and (d * N) % 8 == 0:
            bb = d
            break
    grid = (B // bb,)

    # --- VMEM budget from the *padded* (tiled) per-step footprint ------------
    x_isz = x.dtype.itemsize
    out_isz = jnp.dtype(out_dtype).itemsize
    x_blk = bb * C * H * _round_up(Wp, 8) * _round_up(P, 128) * x_isz
    out_blk = _round_up(bb * N, 8) * E_pad * out_isz
    w_blk = _round_up(K, 8) * E_pad * 2
    interm = (_round_up(bb * N, 8) * _round_up(K, 128) * (4 + 2)   # lhs f32+bf16
              + _round_up(bb * N, 8) * E_pad * 4)                   # f32 acc
    step_bytes = 2 * x_blk + 2 * out_blk + 2 * w_blk + 2 * E_pad * 4 + interm
    # Cap at 40 MiB so the plan still leaves headroom on v7x's 64 MiB VMEM.
    vmem_limit = int(min(max(int(1.3 * step_bytes), 16 * 2**20), 40 * 2**20))

    cost = pl.CostEstimate(
        flops=2 * M * K * E_pad,
        transcendentals=0,
        bytes_accessed=(x.size * x_isz
                        + w_mat.size * 2
                        + b_row.size * 4
                        + M * E_pad * out_isz),
    )

    kernel = functools.partial(_patch_embed_kernel,
                               bb=bb, C=C, H=H, Hp=Hp, Wp=Wp, P=P)

    out = pl.pallas_call(
        kernel,
        out_shape=jax.ShapeDtypeStruct((M, E_pad), out_dtype),
        grid_spec=pltpu.PrefetchScalarGridSpec(
            num_scalar_prefetch=0,
            grid=grid,
            in_specs=[
                # bb whole images per step; contiguous HBM read, raw bytes only.
                pl.BlockSpec((bb, C * H, Wp, P), lambda g: (g, 0, 0, 0)),
                pl.BlockSpec((K, E_pad), lambda g: (0, 0)),     # weight: resident
                pl.BlockSpec((1, E_pad), lambda g: (0, 0)),     # bias: resident
            ],
            out_specs=pl.BlockSpec((bb * N, E_pad), lambda g: (g, 0)),
        ),
        compiler_params=pltpu.CompilerParams(
            dimension_semantics=("parallel",),   # images independent (2 TCs on v7x)
            vmem_limit_bytes=vmem_limit,
        ),
        cost_estimate=cost,
    )(x4, w_mat, b_row)

    if E_pad != E:
        out = out[:, :E]
    return out.reshape(B, N, E)


if __name__ == "__main__":
    # Small shapes consistent with the module: img=16, patch=4, C=4, E=32, B=2.
    B, C, H, W = 2, 4, 16, 16
    P = 4
    E = 32

    key = jax.random.PRNGKey(0)
    kx, kw, kb = jax.random.split(key, 3)
    x = jax.random.normal(kx, (B, C, H, W), dtype=jnp.float32)
    weight = jax.random.normal(kw, (E, C, P, P), dtype=jnp.float32) * 0.02
    bias = jax.random.normal(kb, (E,), dtype=jnp.float32) * 0.02

    out = patch_embedding(x, weight, bias, P)
    out = jax.block_until_ready(out)
    assert out.shape == (B, (H // P) * (W // P), E)
    out_f32 = out.astype(jnp.float32)

    # Reference: conv on bf16-rounded operands (kernel uses bf16 operands with
    # f32 accumulation), plus a looser check vs. the pure-f32 conv.
    def conv_ref(xx, ww):
        r = jax.lax.conv_general_dilated(
            xx, ww, window_strides=(P, P), padding="VALID",
            dimension_numbers=("NCHW", "OIHW", "NCHW"))
        r = r + bias[None, :, None, None]
        return r.reshape(B, E, -1).transpose(0, 2, 1)

    x_bf = x.astype(jnp.bfloat16).astype(jnp.float32)
    w_bf = weight.astype(jnp.bfloat16).astype(jnp.float32)
    ref_bf = conv_ref(x_bf, w_bf)
    ref_f32 = conv_ref(x, weight)
    assert jnp.allclose(out_f32, ref_bf, atol=2e-2, rtol=2e-2)
    assert jnp.allclose(out_f32, ref_f32, atol=5e-2, rtol=5e-2)

    print("KERNEL_OK")
</pallas_src>

<mosaic_0001>
module attributes {stable_mosaic.version = 11 : i64} {
  func.func @_patch_embed_kernel(%arg0: i32, %arg1: memref<2x64x4x4xf32, #tpu.memory_space<vmem>>, %arg2: memref<64x128xbf16, #tpu.memory_space<vmem>>, %arg3: memref<1x128xf32, #tpu.memory_space<vmem>>, %arg4: memref<32x128xbf16, #tpu.memory_space<vmem>>) attributes {dimension_semantics = [#tpu.dimension_semantics<parallel>], iteration_bounds = array<i64: 1>, scalar_prefetch = 0 : i64, scratch_operands = 0 : i64, tpu.core_type = #tpu.core_type<tc>, window_params = [{transform_indices = @transform_0, window_bounds = array<i64: 2, 64, 4, 4>}, {pipeline_mode = #tpu.pipeline_mode<synchronous>, transform_indices = @transform_1, window_bounds = array<i64: 64, 128>}, {pipeline_mode = #tpu.pipeline_mode<synchronous>, transform_indices = @transform_2, window_bounds = array<i64: 1, 128>}, {transform_indices = @transform_3, window_bounds = array<i64: 32, 128>}]} {
    %c0 = arith.constant 0 : index
    %c0_0 = arith.constant 0 : index
    %c0_1 = arith.constant 0 : index
    %c0_2 = arith.constant 0 : index
    %0 = vector.load %arg1[%c0, %c0_0, %c0_1, %c0_2] : memref<2x64x4x4xf32, #tpu.memory_space<vmem>>, vector<1x1x4x4xf32>
    %1 = vector.shape_cast %0 : vector<1x1x4x4xf32> to vector<4x4xf32>
    %c0_3 = arith.constant 0 : index
    %c1 = arith.constant 1 : index
    %c0_4 = arith.constant 0 : index
    %c0_5 = arith.constant 0 : index
    %2 = vector.load %arg1[%c0_3, %c1, %c0_4, %c0_5] : memref<2x64x4x4xf32, #tpu.memory_space<vmem>>, vector<1x1x4x4xf32>
    %3 = vector.shape_cast %2 : vector<1x1x4x4xf32> to vector<4x4xf32>
    %c0_6 = arith.constant 0 : index
    %c2 = arith.constant 2 : index
    %c0_7 = arith.constant 0 : index
    %c0_8 = arith.constant 0 : index
    %4 = vector.load %arg1[%c0_6, %c2, %c0_7, %c0_8] : memref<2x64x4x4xf32, #tpu.memory_space<vmem>>, vector<1x1x4x4xf32>
    %5 = vector.shape_cast %4 : vector<1x1x4x4xf32> to vector<4x4xf32>
    %c0_9 = arith.constant 0 : index
    %c3 = arith.constant 3 : index
    %c0_10 = arith.constant 0 : index
    %c0_11 = arith.constant 0 : index
    %6 = vector.load %arg1[%c0_9, %c3, %c0_10, %c0_11] : memref<2x64x4x4xf32, #tpu.memory_space<vmem>>, vector<1x1x4x4xf32>
    %7 = vector.shape_cast %6 : vector<1x1x4x4xf32> to vector<4x4xf32>
    %c0_12 = arith.constant 0 : index
    %c16 = arith.constant 16 : index
    %c0_13 = arith.constant 0 : index
    %c0_14 = arith.constant 0 : index
    %8 = vector.load %arg1[%c0_12, %c16, %c0_13, %c0_14] : memref<2x64x4x4xf32, #tpu.memory_space<vmem>>, vector<1x1x4x4xf32>
    %9 = vector.shape_cast %8 : vector<1x1x4x4xf32> to vector<4x4xf32>
    %c0_15 = arith.constant 0 : index
    %c17 = arith.constant 17 : index
    %c0_16 = arith.constant 0 : index
    %c0_17 = arith.constant 0 : index
    %10 = vector.load %arg1[%c0_15, %c17, %c0_16, %c0_17] : memref<2x64x4x4xf32, #tpu.memory_space<vmem>>, vector<1x1x4x4xf32>
    %11 = vector.shape_cast %10 : vector<1x1x4x4xf32> to vector<4x4xf32>
    %c0_18 = arith.constant 0 : index
    %c18 = arith.constant 18 : index
    %c0_19 = arith.constant 0 : index
    %c0_20 = arith.constant 0 : index
    %12 = vector.load %arg1[%c0_18, %c18, %c0_19, %c0_20] : memref<2x64x4x4xf32, #tpu.memory_space<vmem>>, vector<1x1x4x4xf32>
    %13 = vector.shape_cast %12 : vector<1x1x4x4xf32> to vector<4x4xf32>
    %c0_21 = arith.constant 0 : index
    %c19 = arith.constant 19 : index
    %c0_22 = arith.constant 0 : index
    %c0_23 = arith.constant 0 : index
    %14 = vector.load %arg1[%c0_21, %c19, %c0_22, %c0_23] : memref<2x64x4x4xf32, #tpu.memory_space<vmem>>, vector<1x1x4x4xf32>
    %15 = vector.shape_cast %14 : vector<1x1x4x4xf32> to vector<4x4xf32>
    %c0_24 = arith.constant 0 : index
    %c32 = arith.constant 32 : index
    %c0_25 = arith.constant 0 : index
    %c0_26 = arith.constant 0 : index
    %16 = vector.load %arg1[%c0_24, %c32, %c0_25, %c0_26] : memref<2x64x4x4xf32, #tpu.memory_space<vmem>>, vector<1x1x4x4xf32>
    %17 = vector.shape_cast %16 : vector<1x1x4x4xf32> to vector<4x4xf32>
    %c0_27 = arith.constant 0 : index
    %c33 = arith.constant 33 : index
    %c0_28 = arith.constant 0 : index
    %c0_29 = arith.constant 0 : index
    %18 = vector.load %arg1[%c0_27, %c33, %c0_28, %c0_29] : memref<2x64x4x4xf32, #tpu.memory_space<vmem>>, vector<1x1x4x4xf32>
    %19 = vector.shape_cast %18 : vector<1x1x4x4xf32> to vector<4x4xf32>
    %c0_30 = arith.constant 0 : index
    %c34 = arith.constant 34 : index
    %c0_31 = arith.constant 0 : index
    %c0_32 = arith.constant 0 : index
    %20 = vector.load %arg1[%c0_30, %c34, %c0_31, %c0_32] : memref<2x64x4x4xf32, #tpu.memory_space<vmem>>, vector<1x1x4x4xf32>
    %21 = vector.shape_cast %20 : vector<1x1x4x4xf32> to vector<4x4xf32>
    %c0_33 = arith.constant 0 : index
    %c35 = arith.constant 35 : index
    %c0_34 = arith.constant 0 : index
    %c0_35 = arith.constant 0 : index
    %22 = vector.load %arg1[%c0_33, %c35, %c0_34, %c0_35] : memref<2x64x4x4xf32, #tpu.memory_space<vmem>>, vector<1x1x4x4xf32>
    %23 = vector.shape_cast %22 : vector<1x1x4x4xf32> to vector<4x4xf32>
    %c0_36 = arith.constant 0 : index
    %c48 = arith.constant 48 : index
    %c0_37 = arith.constant 0 : index
    %c0_38 = arith.constant 0 : index
    %24 = vector.load %arg1[%c0_36, %c48, %c0_37, %c0_38] : memref<2x64x4x4xf32, #tpu.memory_space<vmem>>, vector<1x1x4x4xf32>
    %25 = vector.shape_cast %24 : vector<1x1x4x4xf32> to vector<4x4xf32>
    %c0_39 = arith.constant 0 : index
    %c49 = arith.constant 49 : index
    %c0_40 = arith.constant 0 : index
    %c0_41 = arith.constant 0 : index
    %26 = vector.load %arg1[%c0_39, %c49, %c0_40, %c0_41] : memref<2x64x4x4xf32, #tpu.memory_space<vmem>>, vector<1x1x4x4xf32>
    %27 = vector.shape_cast %26 : vector<1x1x4x4xf32> to vector<4x4xf32>
    %c0_42 = arith.constant 0 : index
    %c50 = arith.constant 50 : index
    %c0_43 = arith.constant 0 : index
    %c0_44 = arith.constant 0 : index
    %28 = vector.load %arg1[%c0_42, %c50, %c0_43, %c0_44] : memref<2x64x4x4xf32, #tpu.memory_space<vmem>>, vector<1x1x4x4xf32>
    %29 = vector.shape_cast %28 : vector<1x1x4x4xf32> to vector<4x4xf32>
    %c0_45 = arith.constant 0 : index
    %c51 = arith.constant 51 : index
    %c0_46 = arith.constant 0 : index
    %c0_47 = arith.constant 0 : index
    %30 = vector.load %arg1[%c0_45, %c51, %c0_46, %c0_47] : memref<2x64x4x4xf32, #tpu.memory_space<vmem>>, vector<1x1x4x4xf32>
    %31 = vector.shape_cast %30 : vector<1x1x4x4xf32> to vector<4x4xf32>
    %32 = tpu.concatenate %1, %3, %5, %7, %9, %11, %13, %15, %17, %19, %21, %23, %25, %27, %29, %31 in 1 : vector<4x4xf32>, vector<4x4xf32>, vector<4x4xf32>, vector<4x4xf32>, vector<4x4xf32>, vector<4x4xf32>, vector<4x4xf32>, vector<4x4xf32>, vector<4x4xf32>, vector<4x4xf32>, vector<4x4xf32>, vector<4x4xf32>, vector<4x4xf32>, vector<4x4xf32>, vector<4x4xf32>, vector<4x4xf32> -> vector<4x64xf32>
    %c0_48 = arith.constant 0 : index
    %c4 = arith.constant 4 : index
    %c0_49 = arith.constant 0 : index
    %c0_50 = arith.constant 0 : index
    %33 = vector.load %arg1[%c0_48, %c4, %c0_49, %c0_50] : memref<2x64x4x4xf32, #tpu.memory_space<vmem>>, vector<1x1x4x4xf32>
    %34 = vector.shape_cast %33 : vector<1x1x4x4xf32> to vector<4x4xf32>
    %c0_51 = arith.constant 0 : index
    %c5 = arith.constant 5 : index
    %c0_52 = arith.constant 0 : index
    %c0_53 = arith.constant 0 : index
    %35 = vector.load %arg1[%c0_51, %c5, %c0_52, %c0_53] : memref<2x64x4x4xf32, #tpu.memory_space<vmem>>, vector<1x1x4x4xf32>
    %36 = vector.shape_cast %35 : vector<1x1x4x4xf32> to vector<4x4xf32>
    %c0_54 = arith.constant 0 : index
    %c6 = arith.constant 6 : index
    %c0_55 = arith.constant 0 : index
    %c0_56 = arith.constant 0 : index
    %37 = vector.load %arg1[%c0_54, %c6, %c0_55, %c0_56] : memref<2x64x4x4xf32, #tpu.memory_space<vmem>>, vector<1x1x4x4xf32>
    %38 = vector.shape_cast %37 : vector<1x1x4x4xf32> to vector<4x4xf32>
    %c0_57 = arith.constant 0 : index
    %c7 = arith.constant 7 : index
    %c0_58 = arith.constant 0 : index
    %c0_59 = arith.constant 0 : index
    %39 = vector.load %arg1[%c0_57, %c7, %c0_58, %c0_59] : memref<2x64x4x4xf32, #tpu.memory_space<vmem>>, vector<1x1x4x4xf32>
    %40 = vector.shape_cast %39 : vector<1x1x4x4xf32> to vector<4x4xf32>
    %c0_60 = arith.constant 0 : index
    %c20 = arith.constant 20 : index
    %c0_61 = arith.constant 0 : index
    %c0_62 = arith.constant 0 : index
    %41 = vector.load %arg1[%c0_60, %c20, %c0_61, %c0_62] : memref<2x64x4x4xf32, #tpu.memory_space<vmem>>, vector<1x1x4x4xf32>
    %42 = vector.shape_cast %41 : vector<1x1x4x4xf32> to vector<4x4xf32>
    %c0_63 = arith.constant 0 : index
    %c21 = arith.constant 21 : index
    %c0_64 = arith.constant 0 : index
    %c0_65 = arith.constant 0 : index
    %43 = vector.load %arg1[%c0_63, %c21, %c0_64, %c0_65] : memref<2x64x4x4xf32, #tpu.memory_space<vmem>>, vector<1x1x4x4xf32>
    %44 = vector.shape_cast %43 : vector<1x1x4x4xf32> to vector<4x4xf32>
    %c0_66 = arith.constant 0 : index
    %c22 = arith.constant 22 : index
    %c0_67 = arith.constant 0 : index
    %c0_68 = arith.constant 0 : index
    %45 = vector.load %arg1[%c0_66, %c22, %c0_67, %c0_68] : memref<2x64x4x4xf32, #tpu.memory_space<vmem>>, vector<1x1x4x4xf32>
    %46 = vector.shape_cast %45 : vector<1x1x4x4xf32> to vector<4x4xf32>
    %c0_69 = arith.constant 0 : index
    %c23 = arith.constant 23 : index
    %c0_70 = arith.constant 0 : index
    %c0_71 = arith.constant 0 : index
    %47 = vector.load %arg1[%c0_69, %c23, %c0_70, %c0_71] : memref<2x64x4x4xf32, #tpu.memory_space<vmem>>, vector<1x1x4x4xf32>
    %48 = vector.shape_cast %47 : vector<1x1x4x4xf32> to vector<4x4xf32>
    %c0_72 = arith.constant 0 : index
    %c36 = arith.constant 36 : index
    %c0_73 = arith.constant 0 : index
    %c0_74 = arith.constant 0 : index
    %49 = vector.load %arg1[%c0_72, %c36, %c0_73, %c0_74] : memref<2x64x4x4xf32, #tpu.memory_space<vmem>>, vector<1x1x4x4xf32>
    %50 = vector.shape_cast %49 : vector<1x1x4x4xf32> to vector<4x4xf32>
    %c0_75 = arith.constant 0 : index
    %c37 = arith.constant 37 : index
    %c0_76 = arith.constant 0 : index
    %c0_77 = arith.constant 0 : index
    %51 = vector.load %arg1[%c0_75, %c37, %c0_76, %c0_77] : memref<2x64x4x4xf32, #tpu.memory_space<vmem>>, vector<1x1x4x4xf32>
    %52 = vector.shape_cast %51 : vector<1x1x4x4xf32> to vector<4x4xf32>
    %c0_78 = arith.constant 0 : index
    %c38 = arith.constant 38 : index
    %c0_79 = arith.constant 0 : index
    %c0_80 = arith.constant 0 : index
    %53 = vector.load %arg1[%c0_78, %c38, %c0_79, %c0_80] : memref<2x64x4x4xf32, #tpu.memory_space<vmem>>, vector<1x1x4x4xf32>
    %54 = vector.shape_cast %53 : vector<1x1x4x4xf32> to vector<4x4xf32>
    %c0_81 = arith.constant 0 : index
    %c39 = arith.constant 39 : index
    %c0_82 = arith.constant 0 : index
    %c0_83 = arith.constant 0 : index
    %55 = vector.load %arg1[%c0_81, %c39, %c0_82, %c0_83] : memref<2x64x4x4xf32, #tpu.memory_space<vmem>>, vector<1x1x4x4xf32>
    %56 = vector.shape_cast %55 : vector<1x1x4x4xf32> to vector<4x4xf32>
    %c0_84 = arith.constant 0 : index
    %c52 = arith.constant 52 : index
    %c0_85 = arith.constant 0 : index
    %c0_86 = arith.constant 0 : index
    %57 = vector.load %arg1[%c0_84, %c52, %c0_85, %c0_86] : memref<2x64x4x4xf32, #tpu.memory_space<vmem>>, vector<1x1x4x4xf32>
    %58 = vector.shape_cast %57 : vector<1x1x4x4xf32> to vector<4x4xf32>
    %c0_87 = arith.constant 0 : index
    %c53 = arith.constant 53 : index
    %c0_88 = arith.constant 0 : index
    %c0_89 = arith.constant 0 : index
    %59 = vector.load %arg1[%c0_87, %c53, %c0_88, %c0_89] : memref<2x64x4x4xf32, #tpu.memory_space<vmem>>, vector<1x1x4x4xf32>
    %60 = vector.shape_cast %59 : vector<1x1x4x4xf32> to vector<4x4xf32>
    %c0_90 = arith.constant 0 : index
    %c54 = arith.constant 54 : index
    %c0_91 = arith.constant 0 : index
    %c0_92 = arith.constant 0 : index
    %61 = vector.load %arg1[%c0_90, %c54, %c0_91, %c0_92] : memref<2x64x4x4xf32, #tpu.memory_space<vmem>>, vector<1x1x4x4xf32>
    %62 = vector.shape_cast %61 : vector<1x1x4x4xf32> to vector<4x4xf32>
    %c0_93 = arith.constant 0 : index
    %c55 = arith.constant 55 : index
    %c0_94 = arith.constant 0 : index
    %c0_95 = arith.constant 0 : index
    %63 = vector.load %arg1[%c0_93, %c55, %c0_94, %c0_95] : memref<2x64x4x4xf32, #tpu.memory_space<vmem>>, vector<1x1x4x4xf32>
    %64 = vector.shape_cast %63 : vector<1x1x4x4xf32> to vector<4x4xf32>
    %65 = tpu.concatenate %34, %36, %38, %40, %42, %44, %46, %48, %50, %52, %54, %56, %58, %60, %62, %64 in 1 : vector<4x4xf32>, vector<4x4xf32>, vector<4x4xf32>, vector<4x4xf32>, vector<4x4xf32>, vector<4x4xf32>, vector<4x4xf32>, vector<4x4xf32>, vector<4x4xf32>, vector<4x4xf32>, vector<4x4xf32>, vector<4x4xf32>, vector<4x4xf32>, vector<4x4xf32>, vector<4x4xf32>, vector<4x4xf32> -> vector<4x64xf32>
    %c0_96 = arith.constant 0 : index
    %c8 = arith.constant 8 : index
    %c0_97 = arith.constant 0 : index
    %c0_98 = arith.constant 0 : index
    %66 = vector.load %arg1[%c0_96, %c8, %c0_97, %c0_98] : memref<2x64x4x4xf32, #tpu.memory_space<vmem>>, vector<1x1x4x4xf32>
    %67 = vector.shape_cast %66 : vector<1x1x4x4xf32> to vector<4x4xf32>
    %c0_99 = arith.constant 0 : index
    %c9 = arith.constant 9 : index
    %c0_100 = arith.constant 0 : index
    %c0_101 = arith.constant 0 : index
    %68 = vector.load %arg1[%c0_99, %c9, %c0_100, %c0_101] : memref<2x64x4x4xf32, #tpu.memory_space<vmem>>, vector<1x1x4x4xf32>
    %69 = vector.shape_cast %68 : vector<1x1x4x4xf32> to vector<4x4xf32>
    %c0_102 = arith.constant 0 : index
    %c10 = arith.constant 10 : index
    %c0_103 = arith.constant 0 : index
    %c0_104 = arith.constant 0 : index
    %70 = vector.load %arg1[%c0_102, %c10, %c0_103, %c0_104] : memref<2x64x4x4xf32, #tpu.memory_space<vmem>>, vector<1x1x4x4xf32>
    %71 = vector.shape_cast %70 : vector<1x1x4x4xf32> to vector<4x4xf32>
    %c0_105 = arith.constant 0 : index
    %c11 = arith.constant 11 : index
    %c0_106 = arith.constant 0 : index
    %c0_107 = arith.constant 0 : index
    %72 = vector.load %arg1[%c0_105, %c11, %c0_106, %c0_107] : memref<2x64x4x4xf32, #tpu.memory_space<vmem>>, vector<1x1x4x4xf32>
    %73 = vector.shape_cast %72 : vector<1x1x4x4xf32> to vector<4x4xf32>
    %c0_108 = arith.constant 0 : index
    %c24 = arith.constant 24 : index
    %c0_109 = arith.constant 0 : index
    %c0_110 = arith.constant 0 : index
    %74 = vector.load %arg1[%c0_108, %c24, %c0_109, %c0_110] : memref<2x64x4x4xf32, #tpu.memory_space<vmem>>, vector<1x1x4x4xf32>
    %75 = vector.shape_cast %74 : vector<1x1x4x4xf32> to vector<4x4xf32>
    %c0_111 = arith.constant 0 : index
    %c25 = arith.constant 25 : index
    %c0_112 = arith.constant 0 : index
    %c0_113 = arith.constant 0 : index
    %76 = vector.load %arg1[%c0_111, %c25, %c0_112, %c0_113] : memref<2x64x4x4xf32, #tpu.memory_space<vmem>>, vector<1x1x4x4xf32>
    %77 = vector.shape_cast %76 : vector<1x1x4x4xf32> to vector<4x4xf32>
    %c0_114 = arith.constant 0 : index
    %c26 = arith.constant 26 : index
    %c0_115 = arith.constant 0 : index
    %c0_116 = arith.constant 0 : index
    %78 = vector.load %arg1[%c0_114, %c26, %c0_115, %c0_116] : memref<2x64x4x4xf32, #tpu.memory_space<vmem>>, vector<1x1x4x4xf32>
    %79 = vector.shape_cast %78 : vector<1x1x4x4xf32> to vector<4x4xf32>
    %c0_117 = arith.constant 0 : index
    %c27 = arith.constant 27 : index
    %c0_118 = arith.constant 0 : index
    %c0_119 = arith.constant 0 : index
    %80 = vector.load %arg1[%c0_117, %c27, %c0_118, %c0_119] : memref<2x64x4x4xf32, #tpu.memory_space<vmem>>, vector<1x1x4x4xf32>
    %81 = vector.shape_cast %80 : vector<1x1x4x4xf32> to vector<4x4xf32>
    %c0_120 = arith.constant 0 : index
    %c40 = arith.constant 40 : index
    %c0_121 = arith.constant 0 : index
    %c0_122 = arith.constant 0 : index
    %82 = vector.load %arg1[%c0_120, %c40, %c0_121, %c0_122] : memref<2x64x4x4xf32, #tpu.memory_space<vmem>>, vector<1x1x4x4xf32>
    %83 = vector.shape_cast %82 : vector<1x1x4x4xf32> to vector<4x4xf32>
    %c0_123 = arith.constant 0 : index
    %c41 = arith.constant 41 : index
    %c0_124 = arith.constant 0 : index
    %c0_125 = arith.constant 0 : index
    %84 = vector.load %arg1[%c0_123, %c41, %c0_124, %c0_125] : memref<2x64x4x4xf32, #tpu.memory_space<vmem>>, vector<1x1x4x4xf32>
    %85 = vector.shape_cast %84 : vector<1x1x4x4xf32> to vector<4x4xf32>
    %c0_126 = arith.constant 0 : index
    %c42 = arith.constant 42 : index
    %c0_127 = arith.constant 0 : index
    %c0_128 = arith.constant 0 : index
    %86 = vector.load %arg1[%c0_126, %c42, %c0_127, %c0_128] : memref<2x64x4x4xf32, #tpu.memory_space<vmem>>, vector<1x1x4x4xf32>
    %87 = vector.shape_cast %86 : vector<1x1x4x4xf32> to vector<4x4xf32>
    %c0_129 = arith.constant 0 : index
    %c43 = arith.constant 43 : index
    %c0_130 = arith.constant 0 : index
    %c0_131 = arith.constant 0 : index
    %88 = vector.load %arg1[%c0_129, %c43, %c0_130, %c0_131] : memref<2x64x4x4xf32, #tpu.memory_space<vmem>>, vector<1x1x4x4xf32>
    %89 = vector.shape_cast %88 : vector<1x1x4x4xf32> to vector<4x4xf32>
    %c0_132 = arith.constant 0 : index
    %c56 = arith.constant 56 : index
    %c0_133 = arith.constant 0 : index
    %c0_134 = arith.constant 0 : index
    %90 = vector.load %arg1[%c0_132, %c56, %c0_133, %c0_134] : memref<2x64x4x4xf32, #tpu.memory_space<vmem>>, vector<1x1x4x4xf32>
    %91 = vector.shape_cast %90 : vector<1x1x4x4xf32> to vector<4x4xf32>
    %c0_135 = arith.constant 0 : index
    %c57 = arith.constant 57 : index
    %c0_136 = arith.constant 0 : index
    %c0_137 = arith.constant 0 : index
    %92 = vector.load %arg1[%c0_135, %c57, %c0_136, %c0_137] : memref<2x64x4x4xf32, #tpu.memory_space<vmem>>, vector<1x1x4x4xf32>
    %93 = vector.shape_cast %92 : vector<1x1x4x4xf32> to vector<4x4xf32>
    %c0_138 = arith.constant 0 : index
    %c58 = arith.constant 58 : index
    %c0_139 = arith.constant 0 : index
    %c0_140 = arith.constant 0 : index
    %94 = vector.load %arg1[%c0_138, %c58, %c0_139, %c0_140] : memref<2x64x4x4xf32, #tpu.memory_space<vmem>>, vector<1x1x4x4xf32>
    %95 = vector.shape_cast %94 : vector<1x1x4x4xf32> to vector<4x4xf32>
    %c0_141 = arith.constant 0 : index
    %c59 = arith.constant 59 : index
    %c0_142 = arith.constant 0 : index
    %c0_143 = arith.constant 0 : index
    %96 = vector.load %arg1[%c0_141, %c59, %c0_142, %c0_143] : memref<2x64x4x4xf32, #tpu.memory_space<vmem>>, vector<1x1x4x4xf32>
    %97 = vector.shape_cast %96 : vector<1x1x4x4xf32> to vector<4x4xf32>
    %98 = tpu.concatenate %67, %69, %71, %73, %75, %77, %79, %81, %83, %85, %87, %89, %91, %93, %95, %97 in 1 : vector<4x4xf32>, vector<4x4xf32>, vector<4x4xf32>, vector<4x4xf32>, vector<4x4xf32>, vector<4x4xf32>, vector<4x4xf32>, vector<4x4xf32>, vector<4x4xf32>, vector<4x4xf32>, vector<4x4xf32>, vector<4x4xf32>, vector<4x4xf32>, vector<4x4xf32>, vector<4x4xf32>, vector<4x4xf32> -> vector<4x64xf32>
    %c0_144 = arith.constant 0 : index
    %c12 = arith.constant 12 : index
    %c0_145 = arith.constant 0 : index
    %c0_146 = arith.constant 0 : index
    %99 = vector.load %arg1[%c0_144, %c12, %c0_145, %c0_146] : memref<2x64x4x4xf32, #tpu.memory_space<vmem>>, vector<1x1x4x4xf32>
    %100 = vector.shape_cast %99 : vector<1x1x4x4xf32> to vector<4x4xf32>
    %c0_147 = arith.constant 0 : index
    %c13 = arith.constant 13 : index
    %c0_148 = arith.constant 0 : index
    %c0_149 = arith.constant 0 : index
    %101 = vector.load %arg1[%c0_147, %c13, %c0_148, %c0_149] : memref<2x64x4x4xf32, #tpu.memory_space<vmem>>, vector<1x1x4x4xf32>
    %102 = vector.shape_cast %101 : vector<1x1x4x4xf32> to vector<4x4xf32>
    %c0_150 = arith.constant 0 : index
    %c14 = arith.constant 14 : index
    %c0_151 = arith.constant 0 : index
    %c0_152 = arith.constant 0 : index
    %103 = vector.load %arg1[%c0_150, %c14, %c0_151, %c0_152] : memref<2x64x4x4xf32, #tpu.memory_space<vmem>>, vector<1x1x4x4xf32>
    %104 = vector.shape_cast %103 : vector<1x1x4x4xf32> to vector<4x4xf32>
    %c0_153 = arith.constant 0 : index
    %c15 = arith.constant 15 : index
    %c0_154 = arith.constant 0 : index
    %c0_155 = arith.constant 0 : index
    %105 = vector.load %arg1[%c0_153, %c15, %c0_154, %c0_155] : memref<2x64x4x4xf32, #tpu.memory_space<vmem>>, vector<1x1x4x4xf32>
    %106 = vector.shape_cast %105 : vector<1x1x4x4xf32> to vector<4x4xf32>
    %c0_156 = arith.constant 0 : index
    %c28 = arith.constant 28 : index
    %c0_157 = arith.constant 0 : index
    %c0_158 = arith.constant 0 : index
    %107 = vector.load %arg1[%c0_156, %c28, %c0_157, %c0_158] : memref<2x64x4x4xf32, #tpu.memory_space<vmem>>, vector<1x1x4x4xf32>
    %108 = vector.shape_cast %107 : vector<1x1x4x4xf32> to vector<4x4xf32>
    %c0_159 = arith.constant 0 : index
    %c29 = arith.constant 29 : index
    %c0_160 = arith.constant 0 : index
    %c0_161 = arith.constant 0 : index
    %109 = vector.load %arg1[%c0_159, %c29, %c0_160, %c0_161] : memref<2x64x4x4xf32, #tpu.memory_space<vmem>>, vector<1x1x4x4xf32>
    %110 = vector.shape_cast %109 : vector<1x1x4x4xf32> to vector<4x4xf32>
    %c0_162 = arith.constant 0 : index
    %c30 = arith.constant 30 : index
    %c0_163 = arith.constant 0 : index
    %c0_164 = arith.constant 0 : index
    %111 = vector.load %arg1[%c0_162, %c30, %c0_163, %c0_164] : memref<2x64x4x4xf32, #tpu.memory_space<vmem>>, vector<1x1x4x4xf32>
    %112 = vector.shape_cast %111 : vector<1x1x4x4xf32> to vector<4x4xf32>
    %c0_165 = arith.constant 0 : index
    %c31 = arith.constant 31 : index
    %c0_166 = arith.constant 0 : index
    %c0_167 = arith.constant 0 : index
    %113 = vector.load %arg1[%c0_165, %c31, %c0_166, %c0_167] : memref<2x64x4x4xf32, #tpu.memory_space<vmem>>, vector<1x1x4x4xf32>
    %114 = vector.shape_cast %113 : vector<1x1x4x4xf32> to vector<4x4xf32>
    %c0_168 = arith.constant 0 : index
    %c44 = arith.constant 44 : index
    %c0_169 = arith.constant 0 : index
    %c0_170 = arith.constant 0 : index
    %115 = vector.load %arg1[%c0_168, %c44, %c0_169, %c0_170] : memref<2x64x4x4xf32, #tpu.memory_space<vmem>>, vector<1x1x4x4xf32>
    %116 = vector.shape_cast %115 : vector<1x1x4x4xf32> to vector<4x4xf32>
    %c0_171 = arith.constant 0 : index
    %c45 = arith.constant 45 : index
    %c0_172 = arith.constant 0 : index
    %c0_173 = arith.constant 0 : index
    %117 = vector.load %arg1[%c0_171, %c45, %c0_172, %c0_173] : memref<2x64x4x4xf32, #tpu.memory_space<vmem>>, vector<1x1x4x4xf32>
    %118 = vector.shape_cast %117 : vector<1x1x4x4xf32> to vector<4x4xf32>
    %c0_174 = arith.constant 0 : index
    %c46 = arith.constant 46 : index
    %c0_175 = arith.constant 0 : index
    %c0_176 = arith.constant 0 : index
    %119 = vector.load %arg1[%c0_174, %c46, %c0_175, %c0_176] : memref<2x64x4x4xf32, #tpu.memory_space<vmem>>, vector<1x1x4x4xf32>
    %120 = vector.shape_cast %119 : vector<1x1x4x4xf32> to vector<4x4xf32>
    %c0_177 = arith.constant 0 : index
    %c47 = arith.constant 47 : index
    %c0_178 = arith.constant 0 : index
    %c0_179 = arith.constant 0 : index
    %121 = vector.load %arg1[%c0_177, %c47, %c0_178, %c0_179] : memref<2x64x4x4xf32, #tpu.memory_space<vmem>>, vector<1x1x4x4xf32>
    %122 = vector.shape_cast %121 : vector<1x1x4x4xf32> to vector<4x4xf32>
    %c0_180 = arith.constant 0 : index
    %c60 = arith.constant 60 : index
    %c0_181 = arith.constant 0 : index
    %c0_182 = arith.constant 0 : index
    %123 = vector.load %arg1[%c0_180, %c60, %c0_181, %c0_182] : memref<2x64x4x4xf32, #tpu.memory_space<vmem>>, vector<1x1x4x4xf32>
    %124 = vector.shape_cast %123 : vector<1x1x4x4xf32> to vector<4x4xf32>
    %c0_183 = arith.constant 0 : index
    %c61 = arith.constant 61 : index
    %c0_184 = arith.constant 0 : index
    %c0_185 = arith.constant 0 : index
    %125 = vector.load %arg1[%c0_183, %c61, %c0_184, %c0_185] : memref<2x64x4x4xf32, #tpu.memory_space<vmem>>, vector<1x1x4x4xf32>
    %126 = vector.shape_cast %125 : vector<1x1x4x4xf32> to vector<4x4xf32>
    %c0_186 = arith.constant 0 : index
    %c62 = arith.constant 62 : index
    %c0_187 = arith.constant 0 : index
    %c0_188 = arith.constant 0 : index
    %127 = vector.load %arg1[%c0_186, %c62, %c0_187, %c0_188] : memref<2x64x4x4xf32, #tpu.memory_space<vmem>>, vector<1x1x4x4xf32>
    %128 = vector.shape_cast %127 : vector<1x1x4x4xf32> to vector<4x4xf32>
    %c0_189 = arith.constant 0 : index
    %c63 = arith.constant 63 : index
    %c0_190 = arith.constant 0 : index
    %c0_191 = arith.constant 0 : index
    %129 = vector.load %arg1[%c0_189, %c63, %c0_190, %c0_191] : memref<2x64x4x4xf32, #tpu.memory_space<vmem>>, vector<1x1x4x4xf32>
    %130 = vector.shape_cast %129 : vector<1x1x4x4xf32> to vector<4x4xf32>
    %131 = tpu.concatenate %100, %102, %104, %106, %108, %110, %112, %114, %116, %118, %120, %122, %124, %126, %128, %130 in 1 : vector<4x4xf32>, vector<4x4xf32>, vector<4x4xf32>, vector<4x4xf32>, vector<4x4xf32>, vector<4x4xf32>, vector<4x4xf32>, vector<4x4xf32>, vector<4x4xf32>, vector<4x4xf32>, vector<4x4xf32>, vector<4x4xf32>, vector<4x4xf32>, vector<4x4xf32>, vector<4x4xf32>, vector<4x4xf32> -> vector<4x64xf32>
    %c1_192 = arith.constant 1 : index
    %c0_193 = arith.constant 0 : index
    %c0_194 = arith.constant 0 : index
    %c0_195 = arith.constant 0 : index
    %132 = vector.load %arg1[%c1_192, %c0_193, %c0_194, %c0_195] : memref<2x64x4x4xf32, #tpu.memory_space<vmem>>, vector<1x1x4x4xf32>
    %133 = vector.shape_cast %132 : vector<1x1x4x4xf32> to vector<4x4xf32>
    %c1_196 = arith.constant 1 : index
    %c1_197 = arith.constant 1 : index
    %c0_198 = arith.constant 0 : index
    %c0_199 = arith.constant 0 : index
    %134 = vector.load %arg1[%c1_196, %c1_197, %c0_198, %c0_199] : memref<2x64x4x4xf32, #tpu.memory_space<vmem>>, vector<1x1x4x4xf32>
    %135 = vector.shape_cast %134 : vector<1x1x4x4xf32> to vector<4x4xf32>
    %c1_200 = arith.constant 1 : index
    %c2_201 = arith.constant 2 : index
    %c0_202 = arith.constant 0 : index
    %c0_203 = arith.constant 0 : index
    %136 = vector.load %arg1[%c1_200, %c2_201, %c0_202, %c0_203] : memref<2x64x4x4xf32, #tpu.memory_space<vmem>>, vector<1x1x4x4xf32>
    %137 = vector.shape_cast %136 : vector<1x1x4x4xf32> to vector<4x4xf32>
    %c1_204 = arith.constant 1 : index
    %c3_205 = arith.constant 3 : index
    %c0_206 = arith.constant 0 : index
    %c0_207 = arith.constant 0 : index
    %138 = vector.load %arg1[%c1_204, %c3_205, %c0_206, %c0_207] : memref<2x64x4x4xf32, #tpu.memory_space<vmem>>, vector<1x1x4x4xf32>
    %139 = vector.shape_cast %138 : vector<1x1x4x4xf32> to vector<4x4xf32>
    %c1_208 = arith.constant 1 : index
    %c16_209 = arith.constant 16 : index
    %c0_210 = arith.constant 0 : index
    %c0_211 = arith.constant 0 : index
    %140 = vector.load %arg1[%c1_208, %c16_209, %c0_210, %c0_211] : memref<2x64x4x4xf32, #tpu.memory_space<vmem>>, vector<1x1x4x4xf32>
    %141 = vector.shape_cast %140 : vector<1x1x4x4xf32> to vector<4x4xf32>
    %c1_212 = arith.constant 1 : index
    %c17_213 = arith.constant 17 : index
    %c0_214 = arith.constant 0 : index
    %c0_215 = arith.constant 0 : index
    %142 = vector.load %arg1[%c1_212, %c17_213, %c0_214, %c0_215] : memref<2x64x4x4xf32, #tpu.memory_space<vmem>>, vector<1x1x4x4xf32>
    %143 = vector.shape_cast %142 : vector<1x1x4x4xf32> to vector<4x4xf32>
    %c1_216 = arith.constant 1 : index
    %c18_217 = arith.constant 18 : index
    %c0_218 = arith.constant 0 : index
    %c0_219 = arith.constant 0 : index
    %144 = vector.load %arg1[%c1_216, %c18_217, %c0_218, %c0_219] : memref<2x64x4x4xf32, #tpu.memory_space<vmem>>, vector<1x1x4x4xf32>
    %145 = vector.shape_cast %144 : vector<1x1x4x4xf32> to vector<4x4xf32>
    %c1_220 = arith.constant 1 : index
    %c19_221 = arith.constant 19 : index
    %c0_222 = arith.constant 0 : index
    %c0_223 = arith.constant 0 : index
    %146 = vector.load %arg1[%c1_220, %c19_221, %c0_222, %c0_223] : memref<2x64x4x4xf32, #tpu.memory_space<vmem>>, vector<1x1x4x4xf32>
    %147 = vector.shape_cast %146 : vector<1x1x4x4xf32> to vector<4x4xf32>
    %c1_224 = arith.constant 1 : index
    %c32_225 = arith.constant 32 : index
    %c0_226 = arith.constant 0 : index
    %c0_227 = arith.constant 0 : index
    %148 = vector.load %arg1[%c1_224, %c32_225, %c0_226, %c0_227] : memref<2x64x4x4xf32, #tpu.memory_space<vmem>>, vector<1x1x4x4xf32>
    %149 = vector.shape_cast %148 : vector<1x1x4x4xf32> to vector<4x4xf32>
    %c1_228 = arith.constant 1 : index
    %c33_229 = arith.constant 33 : index
    %c0_230 = arith.constant 0 : index
    %c0_231 = arith.constant 0 : index
    %150 = vector.load %arg1[%c1_228, %c33_229, %c0_230, %c0_231] : memref<2x64x4x4xf32, #tpu.memory_space<vmem>>, vector<1x1x4x4xf32>
    %151 = vector.shape_cast %150 : vector<1x1x4x4xf32> to vector<4x4xf32>
    %c1_232 = arith.constant 1 : index
    %c34_233 = arith.constant 34 : index
    %c0_234 = arith.constant 0 : index
    %c0_235 = arith.constant 0 : index
    %152 = vector.load %arg1[%c1_232, %c34_233, %c0_234, %c0_235] : memref<2x64x4x4xf32, #tpu.memory_space<vmem>>, vector<1x1x4x4xf32>
    %153 = vector.shape_cast %152 : vector<1x1x4x4xf32> to vector<4x4xf32>
    %c1_236 = arith.constant 1 : index
    %c35_237 = arith.constant 35 : index
    %c0_238 = arith.constant 0 : index
    %c0_239 = arith.constant 0 : index
    %154 = vector.load %arg1[%c1_236, %c35_237, %c0_238, %c0_239] : memref<2x64x4x4xf32, #tpu.memory_space<vmem>>, vector<1x1x4x4xf32>
    %155 = vector.shape_cast %154 : vector<1x1x4x4xf32> to vector<4x4xf32>
    %c1_240 = arith.constant 1 : index
    %c48_241 = arith.constant 48 : index
    %c0_242 = arith.constant 0 : index
    %c0_243 = arith.constant 0 : index
    %156 = vector.load %arg1[%c1_240, %c48_241, %c0_242, %c0_243] : memref<2x64x4x4xf32, #tpu.memory_space<vmem>>, vector<1x1x4x4xf32>
    %157 = vector.shape_cast %156 : vector<1x1x4x4xf32> to vector<4x4xf32>
    %c1_244 = arith.constant 1 : index
    %c49_245 = arith.constant 49 : index
    %c0_246 = arith.constant 0 : index
    %c0_247 = arith.constant 0 : index
    %158 = vector.load %arg1[%c1_244, %c49_245, %c0_246, %c0_247] : memref<2x64x4x4xf32, #tpu.memory_space<vmem>>, vector<1x1x4x4xf32>
    %159 = vector.shape_cast %158 : vector<1x1x4x4xf32> to vector<4x4xf32>
    %c1_248 = arith.constant 1 : index
    %c50_249 = arith.constant 50 : index
    %c0_250 = arith.constant 0 : index
    %c0_251 = arith.constant 0 : index
    %160 = vector.load %arg1[%c1_248, %c50_249, %c0_250, %c0_251] : memref<2x64x4x4xf32, #tpu.memory_space<vmem>>, vector<1x1x4x4xf32>
    %161 = vector.shape_cast %160 : vector<1x1x4x4xf32> to vector<4x4xf32>
    %c1_252 = arith.constant 1 : index
    %c51_253 = arith.constant 51 : index
    %c0_254 = arith.constant 0 : index
    %c0_255 = arith.constant 0 : index
    %162 = vector.load %arg1[%c1_252, %c51_253, %c0_254, %c0_255] : memref<2x64x4x4xf32, #tpu.memory_space<vmem>>, vector<1x1x4x4xf32>
    %163 = vector.shape_cast %162 : vector<1x1x4x4xf32> to vector<4x4xf32>
    %164 = tpu.concatenate %133, %135, %137, %139, %141, %143, %145, %147, %149, %151, %153, %155, %157, %159, %161, %163 in 1 : vector<4x4xf32>, vector<4x4xf32>, vector<4x4xf32>, vector<4x4xf32>, vector<4x4xf32>, vector<4x4xf32>, vector<4x4xf32>, vector<4x4xf32>, vector<4x4xf32>, vector<4x4xf32>, vector<4x4xf32>, vector<4x4xf32>, vector<4x4xf32>, vector<4x4xf32>, vector<4x4xf32>, vector<4x4xf32> -> vector<4x64xf32>
    %c1_256 = arith.constant 1 : index
    %c4_257 = arith.constant 4 : index
    %c0_258 = arith.constant 0 : index
    %c0_259 = arith.constant 0 : index
    %165 = vector.load %arg1[%c1_256, %c4_257, %c0_258, %c0_259] : memref<2x64x4x4xf32, #tpu.memory_space<vmem>>, vector<1x1x4x4xf32>
    %166 = vector.shape_cast %165 : vector<1x1x4x4xf32> to vector<4x4xf32>
    %c1_260 = arith.constant 1 : index
    %c5_261 = arith.constant 5 : index
    %c0_262 = arith.constant 0 : index
    %c0_263 = arith.constant 0 : index
    %167 = vector.load %arg1[%c1_260, %c5_261, %c0_262, %c0_263] : memref<2x64x4x4xf32, #tpu.memory_space<vmem>>, vector<1x1x4x4xf32>
    %168 = vector.shape_cast %167 : vector<1x1x4x4xf32> to vector<4x4xf32>
    %c1_264 = arith.constant 1 : index
    %c6_265 = arith.constant 6 : index
    %c0_266 = arith.constant 0 : index
    %c0_267 = arith.constant 0 : index
    %169 = vector.load %arg1[%c1_264, %c6_265, %c0_266, %c0_267] : memref<2x64x4x4xf32, #tpu.memory_space<vmem>>, vector<1x1x4x4xf32>
    %170 = vector.shape_cast %169 : vector<1x1x4x4xf32> to vector<4x4xf32>
    %c1_268 = arith.constant 1 : index
    %c7_269 = arith.constant 7 : index
    %c0_270 = arith.constant 0 : index
    %c0_271 = arith.constant 0 : index
    %171 = vector.load %arg1[%c1_268, %c7_269, %c0_270, %c0_271] : memref<2x64x4x4xf32, #tpu.memory_space<vmem>>, vector<1x1x4x4xf32>
    %172 = vector.shape_cast %171 : vector<1x1x4x4xf32> to vector<4x4xf32>
    %c1_272 = arith.constant 1 : index
    %c20_273 = arith.constant 20 : index
    %c0_274 = arith.constant 0 : index
    %c0_275 = arith.constant 0 : index
    %173 = vector.load %arg1[%c1_272, %c20_273, %c0_274, %c0_275] : memref<2x64x4x4xf32, #tpu.memory_space<vmem>>, vector<1x1x4x4xf32>
    %174 = vector.shape_cast %173 : vector<1x1x4x4xf32> to vector<4x4xf32>
    %c1_276 = arith.constant 1 : index
    %c21_277 = arith.constant 21 : index
    %c0_278 = arith.constant 0 : index
    %c0_279 = arith.constant 0 : index
    %175 = vector.load %arg1[%c1_276, %c21_277, %c0_278, %c0_279] : memref<2x64x4x4xf32, #tpu.memory_space<vmem>>, vector<1x1x4x4xf32>
    %176 = vector.shape_cast %175 : vector<1x1x4x4xf32> to vector<4x4xf32>
    %c1_280 = arith.constant 1 : index
    %c22_281 = arith.constant 22 : index
    %c0_282 = arith.constant 0 : index
    %c0_283 = arith.constant 0 : index
    %177 = vector.load %arg1[%c1_280, %c22_281, %c0_282, %c0_283] : memref<2x64x4x4xf32, #tpu.memory_space<vmem>>, vector<1x1x4x4xf32>
    %178 = vector.shape_cast %177 : vector<1x1x4x4xf32> to vector<4x4xf32>
    %c1_284 = arith.constant 1 : index
    %c23_285 = arith.constant 23 : index
    %c0_286 = arith.constant 0 : index
    %c0_287 = arith.constant 0 : index
    %179 = vector.load %arg1[%c1_284, %c23_285, %c0_286, %c0_287] : memref<2x64x4x4xf32, #tpu.memory_space<vmem>>, vector<1x1x4x4xf32>
    %180 = vector.shape_cast %179 : vector<1x1x4x4xf32> to vector<4x4xf32>
    %c1_288 = arith.constant 1 : index
    %c36_289 = arith.constant 36 : index
    %c0_290 = arith.constant 0 : index
    %c0_291 = arith.constant 0 : index
    %181 = vector.load %arg1[%c1_288, %c36_289, %c0_290, %c0_291] : memref<2x64x4x4xf32, #tpu.memory_space<vmem>>, vector<1x1x4x4xf32>
    %182 = vector.shape_cast %181 : vector<1x1x4x4xf32> to vector<4x4xf32>
    %c1_292 = arith.constant 1 : index
    %c37_293 = arith.constant 37 : index
    %c0_294 = arith.constant 0 : index
    %c0_295 = arith.constant 0 : index
    %183 = vector.load %arg1[%c1_292, %c37_293, %c0_294, %c0_295] : memref<2x64x4x4xf32, #tpu.memory_space<vmem>>, vector<1x1x4x4xf32>
    %184 = vector.shape_cast %183 : vector<1x1x4x4xf32> to vector<4x4xf32>
    %c1_296 = arith.constant 1 : index
    %c38_297 = arith.constant 38 : index
    %c0_298 = arith.constant 0 : index
    %c0_299 = arith.constant 0 : index
    %185 = vector.load %arg1[%c1_296, %c38_297, %c0_298, %c0_299] : memref<2x64x4x4xf32, #tpu.memory_space<vmem>>, vector<1x1x4x4xf32>
    %186 = vector.shape_cast %185 : vector<1x1x4x4xf32> to vector<4x4xf32>
    %c1_300 = arith.constant 1 : index
    %c39_301 = arith.constant 39 : index
    %c0_302 = arith.constant 0 : index
    %c0_303 = arith.constant 0 : index
    %187 = vector.load %arg1[%c1_300, %c39_301, %c0_302, %c0_303] : memref<2x64x4x4xf32, #tpu.memory_space<vmem>>, vector<1x1x4x4xf32>
    %188 = vector.shape_cast %187 : vector<1x1x4x4xf32> to vector<4x4xf32>
    %c1_304 = arith.constant 1 : index
    %c52_305 = arith.constant 52 : index
    %c0_306 = arith.constant 0 : index
    %c0_307 = arith.constant 0 : index
    %189 = vector.load %arg1[%c1_304, %c52_305, %c0_306, %c0_307] : memref<2x64x4x4xf32, #tpu.memory_space<vmem>>, vector<1x1x4x4xf32>
    %190 = vector.shape_cast %189 : vector<1x1x4x4xf32> to vector<4x4xf32>
    %c1_308 = arith.constant 1 : index
    %c53_309 = arith.constant 53 : index
    %c0_310 = arith.constant 0 : index
    %c0_311 = arith.constant 0 : index
    %191 = vector.load %arg1[%c1_308, %c53_309, %c0_310, %c0_311] : memref<2x64x4x4xf32, #tpu.memory_space<vmem>>, vector<1x1x4x4xf32>
    %192 = vector.shape_cast %191 : vector<1x1x4x4xf32> to vector<4x4xf32>
    %c1_312 = arith.constant 1 : index
    %c54_313 = arith.constant 54 : index
    %c0_314 = arith.constant 0 : index
    %c0_315 = arith.constant 0 : index
    %193 = vector.load %arg1[%c1_312, %c54_313, %c0_314, %c0_315] : memref<2x64x4x4xf32, #tpu.memory_space<vmem>>, vector<1x1x4x4xf32>
    %194 = vector.shape_cast %193 : vector<1x1x4x4xf32> to vector<4x4xf32>
    %c1_316 = arith.constant 1 : index
    %c55_317 = arith.constant 55 : index
    %c0_318 = arith.constant 0 : index
    %c0_319 = arith.constant 0 : index
    %195 = vector.load %arg1[%c1_316, %c55_317, %c0_318, %c0_319] : memref<2x64x4x4xf32, #tpu.memory_space<vmem>>, vector<1x1x4x4xf32>
    %196 = vector.shape_cast %195 : vector<1x1x4x4xf32> to vector<4x4xf32>
    %197 = tpu.concatenate %166, %168, %170, %172, %174, %176, %178, %180, %182, %184, %186, %188, %190, %192, %194, %196 in 1 : vector<4x4xf32>, vector<4x4xf32>, vector<4x4xf32>, vector<4x4xf32>, vector<4x4xf32>, vector<4x4xf32>, vector<4x4xf32>, vector<4x4xf32>, vector<4x4xf32>, vector<4x4xf32>, vector<4x4xf32>, vector<4x4xf32>, vector<4x4xf32>, vector<4x4xf32>, vector<4x4xf32>, vector<4x4xf32> -> vector<4x64xf32>
    %c1_320 = arith.constant 1 : index
    %c8_321 = arith.constant 8 : index
    %c0_322 = arith.constant 0 : index
    %c0_323 = arith.constant 0 : index
    %198 = vector.load %arg1[%c1_320, %c8_321, %c0_322, %c0_323] : memref<2x64x4x4xf32, #tpu.memory_space<vmem>>, vector<1x1x4x4xf32>
    %199 = vector.shape_cast %198 : vector<1x1x4x4xf32> to vector<4x4xf32>
    %c1_324 = arith.constant 1 : index
    %c9_325 = arith.constant 9 : index
    %c0_326 = arith.constant 0 : index
    %c0_327 = arith.constant 0 : index
    %200 = vector.load %arg1[%c1_324, %c9_325, %c0_326, %c0_327] : memref<2x64x4x4xf32, #tpu.memory_space<vmem>>, vector<1x1x4x4xf32>
    %201 = vector.shape_cast %200 : vector<1x1x4x4xf32> to vector<4x4xf32>
    %c1_328 = arith.constant 1 : index
    %c10_329 = arith.constant 10 : index
    %c0_330 = arith.constant 0 : index
    %c0_331 = arith.constant 0 : index
    %202 = vector.load %arg1[%c1_328, %c10_329, %c0_330, %c0_331] : memref<2x64x4x4xf32, #tpu.memory_space<vmem>>, vector<1x1x4x4xf32>
    %203 = vector.shape_cast %202 : vector<1x1x4x4xf32> to vector<4x4xf32>
    %c1_332 = arith.constant 1 : index
    %c11_333 = arith.constant 11 : index
    %c0_334 = arith.constant 0 : index
    %c0_335 = arith.constant 0 : index
    %204 = vector.load %arg1[%c1_332, %c11_333, %c0_334, %c0_335] : memref<2x64x4x4xf32, #tpu.memory_space<vmem>>, vector<1x1x4x4xf32>
    %205 = vector.shape_cast %204 : vector<1x1x4x4xf32> to vector<4x4xf32>
    %c1_336 = arith.constant 1 : index
    %c24_337 = arith.constant 24 : index
    %c0_338 = arith.constant 0 : index
    %c0_339 = arith.constant 0 : index
    %206 = vector.load %arg1[%c1_336, %c24_337, %c0_338, %c0_339] : memref<2x64x4x4xf32, #tpu.memory_space<vmem>>, vector<1x1x4x4xf32>
    %207 = vector.shape_cast %206 : vector<1x1x4x4xf32> to vector<4x4xf32>
    %c1_340 = arith.constant 1 : index
    %c25_341 = arith.constant 25 : index
    %c0_342 = arith.constant 0 : index
    %c0_343 = arith.constant 0 : index
    %208 = vector.load %arg1[%c1_340, %c25_341, %c0_342, %c0_343] : memref<2x64x4x4xf32, #tpu.memory_space<vmem>>, vector<1x1x4x4xf32>
    %209 = vector.shape_cast %208 : vector<1x1x4x4xf32> to vector<4x4xf32>
    %c1_344 = arith.constant 1 : index
    %c26_345 = arith.constant 26 : index
    %c0_346 = arith.constant 0 : index
    %c0_347 = arith.constant 0 : index
    %210 = vector.load %arg1[%c1_344, %c26_345, %c0_346, %c0_347] : memref<2x64x4x4xf32, #tpu.memory_space<vmem>>, vector<1x1x4x4xf32>
    %211 = vector.shape_cast %210 : vector<1x1x4x4xf32> to vector<4x4xf32>
    %c1_348 = arith.constant 1 : index
    %c27_349 = arith.constant 27 : index
    %c0_350 = arith.constant 0 : index
    %c0_351 = arith.constant 0 : index
    %212 = vector.load %arg1[%c1_348, %c27_349, %c0_350, %c0_351] : memref<2x64x4x4xf32, #tpu.memory_space<vmem>>, vector<1x1x4x4xf32>
    %213 = vector.shape_cast %212 : vector<1x1x4x4xf32> to vector<4x4xf32>
    %c1_352 = arith.constant 1 : index
    %c40_353 = arith.constant 40 : index
    %c0_354 = arith.constant 0 : index
    %c0_355 = arith.constant 0 : index
    %214 = vector.load %arg1[%c1_352, %c40_353, %c0_354, %c0_355] : memref<2x64x4x4xf32, #tpu.memory_space<vmem>>, vector<1x1x4x4xf32>
    %215 = vector.shape_cast %214 : vector<1x1x4x4xf32> to vector<4x4xf32>
    %c1_356 = arith.constant 1 : index
    %c41_357 = arith.constant 41 : index
    %c0_358 = arith.constant 0 : index
    %c0_359 = arith.constant 0 : index
    %216 = vector.load %arg1[%c1_356, %c41_357, %c0_358, %c0_359] : memref<2x64x4x4xf32, #tpu.memory_space<vmem>>, vector<1x1x4x4xf32>
    %217 = vector.shape_cast %216 : vector<1x1x4x4xf32> to vector<4x4xf32>
    %c1_360 = arith.constant 1 : index
    %c42_361 = arith.constant 42 : index
    %c0_362 = arith.constant 0 : index
    %c0_363 = arith.constant 0 : index
    %218 = vector.load %arg1[%c1_360, %c42_361, %c0_362, %c0_363] : memref<2x64x4x4xf32, #tpu.memory_space<vmem>>, vector<1x1x4x4xf32>
    %219 = vector.shape_cast %218 : vector<1x1x4x4xf32> to vector<4x4xf32>
    %c1_364 = arith.constant 1 : index
    %c43_365 = arith.constant 43 : index
    %c0_366 = arith.constant 0 : index
    %c0_367 = arith.constant 0 : index
    %220 = vector.load %arg1[%c1_364, %c43_365, %c0_366, %c0_367] : memref<2x64x4x4xf32, #tpu.memory_space<vmem>>, vector<1x1x4x4xf32>
    %221 = vector.shape_cast %220 : vector<1x1x4x4xf32> to vector<4x4xf32>
    %c1_368 = arith.constant 1 : index
    %c56_369 = arith.constant 56 : index
    %c0_370 = arith.constant 0 : index
    %c0_371 = arith.constant 0 : index
    %222 = vector.load %arg1[%c1_368, %c56_369, %c0_370, %c0_371] : memref<2x64x4x4xf32, #tpu.memory_space<vmem>>, vector<1x1x4x4xf32>
    %223 = vector.shape_cast %222 : vector<1x1x4x4xf32> to vector<4x4xf32>
    %c1_372 = arith.constant 1 : index
    %c57_373 = arith.constant 57 : index
    %c0_374 = arith.constant 0 : index
    %c0_375 = arith.constant 0 : index
    %224 = vector.load %arg1[%c1_372, %c57_373, %c0_374, %c0_375] : memref<2x64x4x4xf32, #tpu.memory_space<vmem>>, vector<1x1x4x4xf32>
    %225 = vector.shape_cast %224 : vector<1x1x4x4xf32> to vector<4x4xf32>
    %c1_376 = arith.constant 1 : index
    %c58_377 = arith.constant 58 : index
    %c0_378 = arith.constant 0 : index
    %c0_379 = arith.constant 0 : index
    %226 = vector.load %arg1[%c1_376, %c58_377, %c0_378, %c0_379] : memref<2x64x4x4xf32, #tpu.memory_space<vmem>>, vector<1x1x4x4xf32>
    %227 = vector.shape_cast %226 : vector<1x1x4x4xf32> to vector<4x4xf32>
    %c1_380 = arith.constant 1 : index
    %c59_381 = arith.constant 59 : index
    %c0_382 = arith.constant 0 : index
    %c0_383 = arith.constant 0 : index
    %228 = vector.load %arg1[%c1_380, %c59_381, %c0_382, %c0_383] : memref<2x64x4x4xf32, #tpu.memory_space<vmem>>, vector<1x1x4x4xf32>
    %229 = vector.shape_cast %228 : vector<1x1x4x4xf32> to vector<4x4xf32>
    %230 = tpu.concatenate %199, %201, %203, %205, %207, %209, %211, %213, %215, %217, %219, %221, %223, %225, %227, %229 in 1 : vector<4x4xf32>, vector<4x4xf32>, vector<4x4xf32>, vector<4x4xf32>, vector<4x4xf32>, vector<4x4xf32>, vector<4x4xf32>, vector<4x4xf32>, vector<4x4xf32>, vector<4x4xf32>, vector<4x4xf32>, vector<4x4xf32>, vector<4x4xf32>, vector<4x4xf32>, vector<4x4xf32>, vector<4x4xf32> -> vector<4x64xf32>
    %c1_384 = arith.constant 1 : index
    %c12_385 = arith.constant 12 : index
    %c0_386 = arith.constant 0 : index
    %c0_387 = arith.constant 0 : index
    %231 = vector.load %arg1[%c1_384, %c12_385, %c0_386, %c0_387] : memref<2x64x4x4xf32, #tpu.memory_space<vmem>>, vector<1x1x4x4xf32>
    %232 = vector.shape_cast %231 : vector<1x1x4x4xf32> to vector<4x4xf32>
    %c1_388 = arith.constant 1 : index
    %c13_389 = arith.constant 13 : index
    %c0_390 = arith.constant 0 : index
    %c0_391 = arith.constant 0 : index
    %233 = vector.load %arg1[%c1_388, %c13_389, %c0_390, %c0_391] : memref<2x64x4x4xf32, #tpu.memory_space<vmem>>, vector<1x1x4x4xf32>
    %234 = vector.shape_cast %233 : vector<1x1x4x4xf32> to vector<4x4xf32>
    %c1_392 = arith.constant 1 : index
    %c14_393 = arith.constant 14 : index
    %c0_394 = arith.constant 0 : index
    %c0_395 = arith.constant 0 : index
    %235 = vector.load %arg1[%c1_392, %c14_393, %c0_394, %c0_395] : memref<2x64x4x4xf32, #tpu.memory_space<vmem>>, vector<1x1x4x4xf32>
    %236 = vector.shape_cast %235 : vector<1x1x4x4xf32> to vector<4x4xf32>
    %c1_396 = arith.constant 1 : index
    %c15_397 = arith.constant 15 : index
    %c0_398 = arith.constant 0 : index
    %c0_399 = arith.constant 0 : index
    %237 = vector.load %arg1[%c1_396, %c15_397, %c0_398, %c0_399] : memref<2x64x4x4xf32, #tpu.memory_space<vmem>>, vector<1x1x4x4xf32>
    %238 = vector.shape_cast %237 : vector<1x1x4x4xf32> to vector<4x4xf32>
    %c1_400 = arith.constant 1 : index
    %c28_401 = arith.constant 28 : index
    %c0_402 = arith.constant 0 : index
    %c0_403 = arith.constant 0 : index
    %239 = vector.load %arg1[%c1_400, %c28_401, %c0_402, %c0_403] : memref<2x64x4x4xf32, #tpu.memory_space<vmem>>, vector<1x1x4x4xf32>
    %240 = vector.shape_cast %239 : vector<1x1x4x4xf32> to vector<4x4xf32>
    %c1_404 = arith.constant 1 : index
    %c29_405 = arith.constant 29 : index
    %c0_406 = arith.constant 0 : index
    %c0_407 = arith.constant 0 : index
    %241 = vector.load %arg1[%c1_404, %c29_405, %c0_406, %c0_407] : memref<2x64x4x4xf32, #tpu.memory_space<vmem>>, vector<1x1x4x4xf32>
    %242 = vector.shape_cast %241 : vector<1x1x4x4xf32> to vector<4x4xf32>
    %c1_408 = arith.constant 1 : index
    %c30_409 = arith.constant 30 : index
    %c0_410 = arith.constant 0 : index
    %c0_411 = arith.constant 0 : index
    %243 = vector.load %arg1[%c1_408, %c30_409, %c0_410, %c0_411] : memref<2x64x4x4xf32, #tpu.memory_space<vmem>>, vector<1x1x4x4xf32>
    %244 = vector.shape_cast %243 : vector<1x1x4x4xf32> to vector<4x4xf32>
    %c1_412 = arith.constant 1 : index
    %c31_413 = arith.constant 31 : index
    %c0_414 = arith.constant 0 : index
    %c0_415 = arith.constant 0 : index
    %245 = vector.load %arg1[%c1_412, %c31_413, %c0_414, %c0_415] : memref<2x64x4x4xf32, #tpu.memory_space<vmem>>, vector<1x1x4x4xf32>
    %246 = vector.shape_cast %245 : vector<1x1x4x4xf32> to vector<4x4xf32>
    %c1_416 = arith.constant 1 : index
    %c44_417 = arith.constant 44 : index
    %c0_418 = arith.constant 0 : index
    %c0_419 = arith.constant 0 : index
    %247 = vector.load %arg1[%c1_416, %c44_417, %c0_418, %c0_419] : memref<2x64x4x4xf32, #tpu.memory_space<vmem>>, vector<1x1x4x4xf32>
    %248 = vector.shape_cast %247 : vector<1x1x4x4xf32> to vector<4x4xf32>
    %c1_420 = arith.constant 1 : index
    %c45_421 = arith.constant 45 : index
    %c0_422 = arith.constant 0 : index
    %c0_423 = arith.constant 0 : index
    %249 = vector.load %arg1[%c1_420, %c45_421, %c0_422, %c0_423] : memref<2x64x4x4xf32, #tpu.memory_space<vmem>>, vector<1x1x4x4xf32>
    %250 = vector.shape_cast %249 : vector<1x1x4x4xf32> to vector<4x4xf32>
    %c1_424 = arith.constant 1 : index
    %c46_425 = arith.constant 46 : index
    %c0_426 = arith.constant 0 : index
    %c0_427 = arith.constant 0 : index
    %251 = vector.load %arg1[%c1_424, %c46_425, %c0_426, %c0_427] : memref<2x64x4x4xf32, #tpu.memory_space<vmem>>, vector<1x1x4x4xf32>
    %252 = vector.shape_cast %251 : vector<1x1x4x4xf32> to vector<4x4xf32>
    %c1_428 = arith.constant 1 : index
    %c47_429 = arith.constant 47 : index
    %c0_430 = arith.constant 0 : index
    %c0_431 = arith.constant 0 : index
    %253 = vector.load %arg1[%c1_428, %c47_429, %c0_430, %c0_431] : memref<2x64x4x4xf32, #tpu.memory_space<vmem>>, vector<1x1x4x4xf32>
    %254 = vector.shape_cast %253 : vector<1x1x4x4xf32> to vector<4x4xf32>
    %c1_432 = arith.constant 1 : index
    %c60_433 = arith.constant 60 : index
    %c0_434 = arith.constant 0 : index
    %c0_435 = arith.constant 0 : index
    %255 = vector.load %arg1[%c1_432, %c60_433, %c0_434, %c0_435] : memref<2x64x4x4xf32, #tpu.memory_space<vmem>>, vector<1x1x4x4xf32>
    %256 = vector.shape_cast %255 : vector<1x1x4x4xf32> to vector<4x4xf32>
    %c1_436 = arith.constant 1 : index
    %c61_437 = arith.constant 61 : index
    %c0_438 = arith.constant 0 : index
    %c0_439 = arith.constant 0 : index
    %257 = vector.load %arg1[%c1_436, %c61_437, %c0_438, %c0_439] : memref<2x64x4x4xf32, #tpu.memory_space<vmem>>, vector<1x1x4x4xf32>
    %258 = vector.shape_cast %257 : vector<1x1x4x4xf32> to vector<4x4xf32>
    %c1_440 = arith.constant 1 : index
    %c62_441 = arith.constant 62 : index
    %c0_442 = arith.constant 0 : index
    %c0_443 = arith.constant 0 : index
    %259 = vector.load %arg1[%c1_440, %c62_441, %c0_442, %c0_443] : memref<2x64x4x4xf32, #tpu.memory_space<vmem>>, vector<1x1x4x4xf32>
    %260 = vector.shape_cast %259 : vector<1x1x4x4xf32> to vector<4x4xf32>
    %c1_444 = arith.constant 1 : index
    %c63_445 = arith.constant 63 : index
    %c0_446 = arith.constant 0 : index
    %c0_447 = arith.constant 0 : index
    %261 = vector.load %arg1[%c1_444, %c63_445, %c0_446, %c0_447] : memref<2x64x4x4xf32, #tpu.memory_space<vmem>>, vector<1x1x4x4xf32>
    %262 = vector.shape_cast %261 : vector<1x1x4x4xf32> to vector<4x4xf32>
    %263 = tpu.concatenate %232, %234, %236, %238, %240, %242, %244, %246, %248, %250, %252, %254, %256, %258, %260, %262 in 1 : vector<4x4xf32>, vector<4x4xf32>, vector<4x4xf32>, vector<4x4xf32>, vector<4x4xf32>, vector<4x4xf32>, vector<4x4xf32>, vector<4x4xf32>, vector<4x4xf32>, vector<4x4xf32>, vector<4x4xf32>, vector<4x4xf32>, vector<4x4xf32>, vector<4x4xf32>, vector<4x4xf32>, vector<4x4xf32> -> vector<4x64xf32>
    %264 = tpu.concatenate %32, %65, %98, %131, %164, %197, %230, %263 in 0 : vector<4x64xf32>, vector<4x64xf32>, vector<4x64xf32>, vector<4x64xf32>, vector<4x64xf32>, vector<4x64xf32>, vector<4x64xf32>, vector<4x64xf32> -> vector<32x64xf32>
    %265 = arith.truncf %264 : vector<32x64xf32> to vector<32x64xbf16>
    %c0_448 = arith.constant 0 : index
    %c0_449 = arith.constant 0 : index
    %266 = vector.load %arg2[%c0_448, %c0_449] : memref<64x128xbf16, #tpu.memory_space<vmem>>, vector<64x128xbf16>
    %cst = arith.constant dense<0.000000e+00> : vector<32x128xf32>
    %267 = tpu.matmul %265, %266, %cst {dimension_numbers = #tpu.dot_dimension_numbers<[1], [0], [0], [1], [0, 0, 1, 1], [], []>} : vector<32x64xbf16>, vector<64x128xbf16>, vector<32x128xf32> -> vector<32x128xf32>
    %c0_450 = arith.constant 0 : index
    %c0_451 = arith.constant 0 : index
    %268 = vector.load %arg3[%c0_450, %c0_451] : memref<1x128xf32, #tpu.memory_space<vmem>>, vector<1x128xf32>
    %269 = vector.broadcast %268 : vector<1x128xf32> to vector<32x128xf32>
    %270 = arith.addf %267, %269 : vector<32x128xf32>
    %271 = arith.truncf %270 : vector<32x128xf32> to vector<32x128xbf16>
    %c0_452 = arith.constant 0 : index
    %c0_453 = arith.constant 0 : index
    %272 = vector.load %arg4[%c0_452, %c0_453] : memref<32x128xbf16, #tpu.memory_space<vmem>>, vector<32x128xbf16>
    tpu.vector_store %arg4[%c0_452, %c0_453], %271 {strides = array<i32>} : memref<32x128xbf16, #tpu.memory_space<vmem>>, vector<32x128xbf16>,
    return
  }
  func.func @transform_0(%arg0: i32) -> (i32, i32, i32, i32) {
    %c0_i32 = arith.constant 0 : i32
    %c0_i32_0 = arith.constant 0 : i32
    %c0_i32_1 = arith.constant 0 : i32
    %c0_i32_2 = arith.constant 0 : i32
    return %arg0, %c0_i32, %c0_i32_0, %c0_i32_1 : i32, i32, i32, i32
  }
  func.func @transform_1(%arg0: i32) -> (i32, i32) {
    %c0_i32 = arith.constant 0 : i32
    %c0_i32_0 = arith.constant 0 : i32
    %c0_i32_1 = arith.constant 0 : i32
    return %c0_i32, %c0_i32_0 : i32, i32
  }
  func.func @transform_2(%arg0: i32) -> (i32, i32) {
    %c0_i32 = arith.constant 0 : i32
    %c0_i32_0 = arith.constant 0 : i32
    %c0_i32_1 = arith.constant 0 : i32
    return %c0_i32, %c0_i32_0 : i32, i32
  }
  func.func @transform_3(%arg0: i32) -> (i32, i32) {
    %c0_i32 = arith.constant 0 : i32
    %c0_i32_0 = arith.constant 0 : i32
    return %arg0, %c0_i32 : i32, i32
  }
}

</mosaic_0001>

<llo_original>
// kernel: patch_embedding.1
$region0: #{patch_embedding.1}
  #allocation0 [shape = 'u32[]', space=smem, size = 0x4, offset = 0x4, fixed_abs, tag = 'smem constant byte address 0x4 - core index']
  #allocation1 [shape = 'u32[144,128]{1,0:T(1,128)}', space=vmem, size = 0x12000, scoped, tag = 'internal scratch']
  %s0 = inlined_call_operand.vmem [shape: f32[2,64,4,4], index: 0, kind: input, shape index: {}]
  %s1 = inlined_call_operand.vmem [shape: bf16[64,128], index: 1, kind: input, shape index: {}]
  %s2 = inlined_call_operand.vmem [shape: f32[1,128], index: 2, kind: input, shape index: {}]
  %s3 = inlined_call_operand.hbm [shape: bf16[32,128], index: 3, kind: output, shape index: {}]
  %s4 = sld [smem:[#allocation0]]
  $region22: #{patch_embedding.1} parent=0
    _
  %s6 = ssub.s32 1, %s4
  %s7 = scalar_select 0, %s6, %s4
  $region1: #{patch_embedding.1} parent=0
    #allocation2 [shape = 'u8[8192]{0}', space=vmem, size = 0x2000, scoped, tag = 'output window, operand 0, single buffered']
    #allocation3 [shape = 's32[1]{0}', space=sflag, size = 0x4, scoped, tag = 'scoped memory for patch_embedding.1']
    %8 = vsyncpa [#allocation3], 0
    // Predicated region
    $region2: #{patch_embedding.1} parent=1 // pred_check
      _
    $region3: #{patch_embedding.1} parent=1 // pred_check_branch
      %10 = sbr.rel (0) target = $region5
    $region4: #{patch_embedding.1} parent=1 // pred_region
      _
    $region5: #{patch_embedding.1} parent=1 // pred_fallthru
      _
    // Predicated region
    $region6: #{patch_embedding.1} parent=1 // pred_check
      _
    $region7: #{patch_embedding.1} parent=1 // pred_check_branch
      %12 = sbr.rel (0) target = $region9
    $region8: #{patch_embedding.1} parent=1 // pred_region
      _
    $region9: #{patch_embedding.1} parent=1 // pred_fallthru
      _
    // Predicated region
    $region10: #{patch_embedding.1} parent=1 // pred_check
      _
    $region11: #{patch_embedding.1} parent=1 // pred_check_branch
      %14 = sbr.rel (0) target = $region13
    $region12: #{patch_embedding.1} parent=1 // pred_region
      _
    $region13: #{patch_embedding.1} parent=1 // pred_fallthru
      _
    %v16 = vld [vmem:[%s0] sm:$0xf]
    %s17 = scalar_lea.vmem %s0, 4
    %v18 = vld [vmem:[%s17] sm:$0xf]
    %s19 = scalar_lea.vmem %s0, 8
    %v20 = vld [vmem:[%s19] sm:$0xf]
    %s21 = scalar_lea.vmem %s0, 12
    %v22 = vld [vmem:[%s21] sm:$0xf]
    %s23 = scalar_lea.vmem %s0, 64
    %v24 = vld [vmem:[%s23] sm:$0xf]
    %s25 = scalar_lea.vmem %s0, 68
    %v26 = vld [vmem:[%s25] sm:$0xf]
    %s27 = scalar_lea.vmem %s0, 72
    %v28 = vld [vmem:[%s27] sm:$0xf]
    %s29 = scalar_lea.vmem %s0, 76
    %v30 = vld [vmem:[%s29] sm:$0xf]
    %s31 = scalar_lea.vmem %s0, 128
    %v32 = vld [vmem:[%s31] sm:$0xf]
    %s33 = scalar_lea.vmem %s0, 132
    %v34 = vld [vmem:[%s33] sm:$0xf]
    %s35 = scalar_lea.vmem %s0, 136
    %v36 = vld [vmem:[%s35] sm:$0xf]
    %s37 = scalar_lea.vmem %s0, 140
    %v38 = vld [vmem:[%s37] sm:$0xf]
    %s39 = scalar_lea.vmem %s0, 192
    %v40 = vld [vmem:[%s39] sm:$0xf]
    %s41 = scalar_lea.vmem %s0, 196
    %v42 = vld [vmem:[%s41] sm:$0xf]
    %s43 = scalar_lea.vmem %s0, 200
    %v44 = vld [vmem:[%s43] sm:$0xf]
    %s45 = scalar_lea.vmem %s0, 204
    %v46 = vld [vmem:[%s45] sm:$0xf]
    %48 = vrot.lane.b32.xlu0 %v18, 4
    %v49 = vpop.permute.xlu0 %48
    %52 = vrot.lane.b32.xlu0 %v20, 8
    %v53 = vpop.permute.xlu0 %52
    %56 = vrot.lane.b32.xlu0 %v22, 12
    %v57 = vpop.permute.xlu0 %56
    %60 = vrot.lane.b32.xlu0 %v24, 16
    %v61 = vpop.permute.xlu0 %60
    %64 = vrot.lane.b32.xlu0 %v26, 20
    %v65 = vpop.permute.xlu0 %64
    %68 = vrot.lane.b32.xlu0 %v28, 24
    %v69 = vpop.permute.xlu0 %68
    %72 = vrot.lane.b32.xlu0 %v30, 28
    %v73 = vpop.permute.xlu0 %72
    %76 = vrot.lane.b32.xlu0 %v32, 32
    %v77 = vpop.permute.xlu0 %76
    %80 = vrot.lane.b32.xlu0 %v34, 36
    %v81 = vpop.permute.xlu0 %80
    %84 = vrot.lane.b32.xlu0 %v36, 40
    %v85 = vpop.permute.xlu0 %84
    %88 = vrot.lane.b32.xlu0 %v38, 44
    %v89 = vpop.permute.xlu0 %88
    %92 = vrot.lane.b32.xlu0 %v40, 48
    %v93 = vpop.permute.xlu0 %92
    %96 = vrot.lane.b32.xlu0 %v42, 52
    %v97 = vpop.permute.xlu0 %96
    %100 = vrot.lane.b32.xlu0 %v44, 56
    %v101 = vpop.permute.xlu0 %100
    %104 = vrot.lane.b32.xlu0 %v46, 60
    %v105 = vpop.permute.xlu0 %104
    %vm107 = vcmask 31744
    %v108 = vsel %vm107, %v16, %v49
    %vm109 = vcmask 64512
    %v110 = vsel %vm109, %v108, %v53
    %vm111 = vcmask 97280
    %v112 = vsel %vm111, %v110, %v57
    %vm113 = vcmask 130048
    %v114 = vsel %vm113, %v112, %v61
    %vm115 = vcmask 162816
    %v116 = vsel %vm115, %v114, %v65
    %vm117 = vcmask 195584
    %v118 = vsel %vm117, %v116, %v69
    %vm119 = vcmask 228352
    %v120 = vsel %vm119, %v118, %v73
    %vm121 = vcmask 261120
    %v122 = vsel %vm121, %v120, %v77
    %vm123 = vcmask 293888
    %v124 = vsel %vm123, %v122, %v81
    %vm125 = vcmask 326656
    %v126 = vsel %vm125, %v124, %v85
    %vm127 = vcmask 359424
    %v128 = vsel %vm127, %v126, %v89
    %vm129 = vcmask 392192
    %v130 = vsel %vm129, %v128, %v93
    %vm131 = vcmask 424960
    %v132 = vsel %vm131, %v130, %v97
    %vm133 = vcmask 457728
    %v134 = vsel %vm133, %v132, %v101
    %vm135 = vcmask 490496
    %v136 = vsel %vm135, %v134, %v105
    %s137 = scalar_lea.vmem %s0, 16
    %v138 = vld [vmem:[%s137] sm:$0xf]
    %s139 = scalar_lea.vmem %s0, 20
    %v140 = vld [vmem:[%s139] sm:$0xf]
    %s141 = scalar_lea.vmem %s0, 24
    %v142 = vld [vmem:[%s141] sm:$0xf]
    %s143 = scalar_lea.vmem %s0, 28
    %v144 = vld [vmem:[%s143] sm:$0xf]
    %s145 = scalar_lea.vmem %s0, 80
    %v146 = vld [vmem:[%s145] sm:$0xf]
    %s147 = scalar_lea.vmem %s0, 84
    %v148 = vld [vmem:[%s147] sm:$0xf]
    %s149 = scalar_lea.vmem %s0, 88
    %v150 = vld [vmem:[%s149] sm:$0xf]
    %s151 = scalar_lea.vmem %s0, 92
    %v152 = vld [vmem:[%s151] sm:$0xf]
    %s153 = scalar_lea.vmem %s0, 144
    %v154 = vld [vmem:[%s153] sm:$0xf]
    %s155 = scalar_lea.vmem %s0, 148
    %v156 = vld [vmem:[%s155] sm:$0xf]
    %s157 = scalar_lea.vmem %s0, 152
    %v158 = vld [vmem:[%s157] sm:$0xf]
    %s159 = scalar_lea.vmem %s0, 156
    %v160 = vld [vmem:[%s159] sm:$0xf]
    %s161 = scalar_lea.vmem %s0, 208
    %v162 = vld [vmem:[%s161] sm:$0xf]
    %s163 = scalar_lea.vmem %s0, 212
    %v164 = vld [vmem:[%s163] sm:$0xf]
    %s165 = scalar_lea.vmem %s0, 216
    %v166 = vld [vmem:[%s165] sm:$0xf]
    %s167 = scalar_lea.vmem %s0, 220
    %v168 = vld [vmem:[%s167] sm:$0xf]
    %170 = vrot.lane.b32.xlu0 %v140, 4
    %v171 = vpop.permute.xlu0 %170
    %174 = vrot.lane.b32.xlu0 %v142, 8
    %v175 = vpop.permute.xlu0 %174
    %178 = vrot.lane.b32.xlu0 %v144, 12
    %v179 = vpop.permute.xlu0 %178
    %182 = vrot.lane.b32.xlu0 %v146, 16
    %v183 = vpop.permute.xlu0 %182
    %186 = vrot.lane.b32.xlu0 %v148, 20
    %v187 = vpop.permute.xlu0 %186
    %190 = vrot.lane.b32.xlu0 %v150, 24
    %v191 = vpop.permute.xlu0 %190
    %194 = vrot.lane.b32.xlu0 %v152, 28
    %v195 = vpop.permute.xlu0 %194
    %198 = vrot.lane.b32.xlu0 %v154, 32
    %v199 = vpop.permute.xlu0 %198
    %202 = vrot.lane.b32.xlu0 %v156, 36
    %v203 = vpop.permute.xlu0 %202
    %206 = vrot.lane.b32.xlu0 %v158, 40
    %v207 = vpop.permute.xlu0 %206
    %210 = vrot.lane.b32.xlu0 %v160, 44
    %v211 = vpop.permute.xlu0 %210
    %214 = vrot.lane.b32.xlu0 %v162, 48
    %v215 = vpop.permute.xlu0 %214
    %218 = vrot.lane.b32.xlu0 %v164, 52
    %v219 = vpop.permute.xlu0 %218
    %222 = vrot.lane.b32.xlu0 %v166, 56
    %v223 = vpop.permute.xlu0 %222
    %226 = vrot.lane.b32.xlu0 %v168, 60
    %v227 = vpop.permute.xlu0 %226
    %v229 = vsel %vm107, %v138, %v171
    %v230 = vsel %vm109, %v229, %v175
    %v231 = vsel %vm111, %v230, %v179
    %v232 = vsel %vm113, %v231, %v183
    %v233 = vsel %vm115, %v232, %v187
    %v234 = vsel %vm117, %v233, %v191
    %v235 = vsel %vm119, %v234, %v195
    %v236 = vsel %vm121, %v235, %v199
    %v237 = vsel %vm123, %v236, %v203
    %v238 = vsel %vm125, %v237, %v207
    %v239 = vsel %vm127, %v238, %v211
    %v240 = vsel %vm129, %v239, %v215
    %v241 = vsel %vm131, %v240, %v219
    %v242 = vsel %vm133, %v241, %v223
    %v243 = vsel %vm135, %v242, %v227
    %s244 = scalar_lea.vmem %s0, 32
    %v245 = vld [vmem:[%s244] sm:$0xf]
    %s246 = scalar_lea.vmem %s0, 36
    %v247 = vld [vmem:[%s246] sm:$0xf]
    %s248 = scalar_lea.vmem %s0, 40
    %v249 = vld [vmem:[%s248] sm:$0xf]
    %s250 = scalar_lea.vmem %s0, 44
    %v251 = vld [vmem:[%s250] sm:$0xf]
    %s252 = scalar_lea.vmem %s0, 96
    %v253 = vld [vmem:[%s252] sm:$0xf]
    %s254 = scalar_lea.vmem %s0, 100
    %v255 = vld [vmem:[%s254] sm:$0xf]
    %s256 = scalar_lea.vmem %s0, 104
    %v257 = vld [vmem:[%s256] sm:$0xf]
    %s258 = scalar_lea.vmem %s0, 108
    %v259 = vld [vmem:[%s258] sm:$0xf]
    %s260 = scalar_lea.vmem %s0, 160
    %v261 = vld [vmem:[%s260] sm:$0xf]
    %s262 = scalar_lea.vmem %s0, 164
    %v263 = vld [vmem:[%s262] sm:$0xf]
    %s264 = scalar_lea.vmem %s0, 168
    %v265 = vld [vmem:[%s264] sm:$0xf]
    %s266 = scalar_lea.vmem %s0, 172
    %v267 = vld [vmem:[%s266] sm:$0xf]
    %s268 = scalar_lea.vmem %s0, 224
    %v269 = vld [vmem:[%s268] sm:$0xf]
    %s270 = scalar_lea.vmem %s0, 228
    %v271 = vld [vmem:[%s270] sm:$0xf]
    %s272 = scalar_lea.vmem %s0, 232
    %v273 = vld [vmem:[%s272] sm:$0xf]
    %s274 = scalar_lea.vmem %s0, 236
    %v275 = vld [vmem:[%s274] sm:$0xf]
    %277 = vrot.lane.b32.xlu0 %v247, 4
    %v278 = vpop.permute.xlu0 %277
    %281 = vrot.lane.b32.xlu0 %v249, 8
    %v282 = vpop.permute.xlu0 %281
    %285 = vrot.lane.b32.xlu0 %v251, 12
    %v286 = vpop.permute.xlu0 %285
    %289 = vrot.lane.b32.xlu0 %v253, 16
    %v290 = vpop.permute.xlu0 %289
    %293 = vrot.lane.b32.xlu0 %v255, 20
    %v294 = vpop.permute.xlu0 %293
    %297 = vrot.lane.b32.xlu0 %v257, 24
    %v298 = vpop.permute.xlu0 %297
    %301 = vrot.lane.b32.xlu0 %v259, 28
    %v302 = vpop.permute.xlu0 %301
    %305 = vrot.lane.b32.xlu0 %v261, 32
    %v306 = vpop.permute.xlu0 %305
    %309 = vrot.lane.b32.xlu0 %v263, 36
    %v310 = vpop.permute.xlu0 %309
    %313 = vrot.lane.b32.xlu0 %v265, 40
    %v314 = vpop.permute.xlu0 %313
    %317 = vrot.lane.b32.xlu0 %v267, 44
    %v318 = vpop.permute.xlu0 %317
    %321 = vrot.lane.b32.xlu0 %v269, 48
    %v322 = vpop.permute.xlu0 %321
    %325 = vrot.lane.b32.xlu0 %v271, 52
    %v326 = vpop.permute.xlu0 %325
    %329 = vrot.lane.b32.xlu0 %v273, 56
    %v330 = vpop.permute.xlu0 %329
    %333 = vrot.lane.b32.xlu0 %v275, 60
    %v334 = vpop.permute.xlu0 %333
    %v336 = vsel %vm107, %v245, %v278
    %v337 = vsel %vm109, %v336, %v282
    %v338 = vsel %vm111, %v337, %v286
    %v339 = vsel %vm113, %v338, %v290
    %v340 = vsel %vm115, %v339, %v294
    %v341 = vsel %vm117, %v340, %v298
    %v342 = vsel %vm119, %v341, %v302
    %v343 = vsel %vm121, %v342, %v306
    %v344 = vsel %vm123, %v343, %v310
    %v345 = vsel %vm125, %v344, %v314
    %v346 = vsel %vm127, %v345, %v318
    %v347 = vsel %vm129, %v346, %v322
    %v348 = vsel %vm131, %v347, %v326
    %v349 = vsel %vm133, %v348, %v330
    %v350 = vsel %vm135, %v349, %v334
    %s351 = scalar_lea.vmem %s0, 48
    %v352 = vld [vmem:[%s351] sm:$0xf]
    %s353 = scalar_lea.vmem %s0, 52
    %v354 = vld [vmem:[%s353] sm:$0xf]
    %s355 = scalar_lea.vmem %s0, 56
    %v356 = vld [vmem:[%s355] sm:$0xf]
    %s357 = scalar_lea.vmem %s0, 60
    %v358 = vld [vmem:[%s357] sm:$0xf]
    %s359 = scalar_lea.vmem %s0, 112
    %v360 = vld [vmem:[%s359] sm:$0xf]
    %s361 = scalar_lea.vmem %s0, 116
    %v362 = vld [vmem:[%s361] sm:$0xf]
    %s363 = scalar_lea.vmem %s0, 120
    %v364 = vld [vmem:[%s363] sm:$0xf]
    %s365 = scalar_lea.vmem %s0, 124
    %v366 = vld [vmem:[%s365] sm:$0xf]
    %s367 = scalar_lea.vmem %s0, 176
    %v368 = vld [vmem:[%s367] sm:$0xf]
    %s369 = scalar_lea.vmem %s0, 180
    %v370 = vld [vmem:[%s369] sm:$0xf]
    %s371 = scalar_lea.vmem %s0, 184
    %v372 = vld [vmem:[%s371] sm:$0xf]
    %s373 = scalar_lea.vmem %s0, 188
    %v374 = vld [vmem:[%s373] sm:$0xf]
    %s375 = scalar_lea.vmem %s0, 240
    %v376 = vld [vmem:[%s375] sm:$0xf]
    %s377 = scalar_lea.vmem %s0, 244
    %v378 = vld [vmem:[%s377] sm:$0xf]
    %s379 = scalar_lea.vmem %s0, 248
    %v380 = vld [vmem:[%s379] sm:$0xf]
    %s381 = scalar_lea.vmem %s0, 252
    %v382 = vld [vmem:[%s381] sm:$0xf]
    %384 = vrot.lane.b32.xlu0 %v354, 4
    %v385 = vpop.permute.xlu0 %384
    %388 = vrot.lane.b32.xlu0 %v356, 8
    %v389 = vpop.permute.xlu0 %388
    %392 = vrot.lane.b32.xlu0 %v358, 12
    %v393 = vpop.permute.xlu0 %392
    %396 = vrot.lane.b32.xlu0 %v360, 16
    %v397 = vpop.permute.xlu0 %396
    %400 = vrot.lane.b32.xlu0 %v362, 20
    %v401 = vpop.permute.xlu0 %400
    %404 = vrot.lane.b32.xlu0 %v364, 24
    %v405 = vpop.permute.xlu0 %404
    %408 = vrot.lane.b32.xlu0 %v366, 28
    %v409 = vpop.permute.xlu0 %408
    %412 = vrot.lane.b32.xlu0 %v368, 32
    %v413 = vpop.permute.xlu0 %412
    %416 = vrot.lane.b32.xlu0 %v370, 36
    %v417 = vpop.permute.xlu0 %416
    %420 = vrot.lane.b32.xlu0 %v372, 40
    %v421 = vpop.permute.xlu0 %420
    %424 = vrot.lane.b32.xlu0 %v374, 44
    %v425 = vpop.permute.xlu0 %424
    %428 = vrot.lane.b32.xlu0 %v376, 48
    %v429 = vpop.permute.xlu0 %428
    %432 = vrot.lane.b32.xlu0 %v378, 52
    %v433 = vpop.permute.xlu0 %432
    %436 = vrot.lane.b32.xlu0 %v380, 56
    %v437 = vpop.permute.xlu0 %436
    %440 = vrot.lane.b32.xlu0 %v382, 60
    %v441 = vpop.permute.xlu0 %440
    %v443 = vsel %vm107, %v352, %v385
    %v444 = vsel %vm109, %v443, %v389
    %v445 = vsel %vm111, %v444, %v393
    %v446 = vsel %vm113, %v445, %v397
    %v447 = vsel %vm115, %v446, %v401
    %v448 = vsel %vm117, %v447, %v405
    %v449 = vsel %vm119, %v448, %v409
    %v450 = vsel %vm121, %v449, %v413
    %v451 = vsel %vm123, %v450, %v417
    %v452 = vsel %vm125, %v451, %v421
    %v453 = vsel %vm127, %v452, %v425
    %v454 = vsel %vm129, %v453, %v429
    %v455 = vsel %vm131, %v454, %v433
    %v456 = vsel %vm133, %v455, %v437
    %v457 = vsel %vm135, %v456, %v441
    %s458 = scalar_lea.vmem %s0, 256
    %v459 = vld [vmem:[%s458] sm:$0xf]
    %s460 = scalar_lea.vmem %s0, 260
    %v461 = vld [vmem:[%s460] sm:$0xf]
    %s462 = scalar_lea.vmem %s0, 264
    %v463 = vld [vmem:[%s462] sm:$0xf]
    %s464 = scalar_lea.vmem %s0, 268
    %v465 = vld [vmem:[%s464] sm:$0xf]
    %s466 = scalar_lea.vmem %s0, 320
    %v467 = vld [vmem:[%s466] sm:$0xf]
    %s468 = scalar_lea.vmem %s0, 324
    %v469 = vld [vmem:[%s468] sm:$0xf]
    %s470 = scalar_lea.vmem %s0, 328
    %v471 = vld [vmem:[%s470] sm:$0xf]
    %s472 = scalar_lea.vmem %s0, 332
    %v473 = vld [vmem:[%s472] sm:$0xf]
    %s474 = scalar_lea.vmem %s0, 384
    %v475 = vld [vmem:[%s474] sm:$0xf]
    %s476 = scalar_lea.vmem %s0, 388
    %v477 = vld [vmem:[%s476] sm:$0xf]
    %s478 = scalar_lea.vmem %s0, 392
    %v479 = vld [vmem:[%s478] sm:$0xf]
    %s480 = scalar_lea.vmem %s0, 396
    %v481 = vld [vmem:[%s480] sm:$0xf]
    %s482 = scalar_lea.vmem %s0, 448
    %v483 = vld [vmem:[%s482] sm:$0xf]
    %s484 = scalar_lea.vmem %s0, 452
    %v485 = vld [vmem:[%s484] sm:$0xf]
    %s486 = scalar_lea.vmem %s0, 456
    %v487 = vld [vmem:[%s486] sm:$0xf]
    %s488 = scalar_lea.vmem %s0, 460
    %v489 = vld [vmem:[%s488] sm:$0xf]
    %491 = vrot.lane.b32.xlu0 %v461, 4
    %v492 = vpop.permute.xlu0 %491
    %495 = vrot.lane.b32.xlu0 %v463, 8
    %v496 = vpop.permute.xlu0 %495
    %499 = vrot.lane.b32.xlu0 %v465, 12
    %v500 = vpop.permute.xlu0 %499
    %503 = vrot.lane.b32.xlu0 %v467, 16
    %v504 = vpop.permute.xlu0 %503
    %507 = vrot.lane.b32.xlu0 %v469, 20
    %v508 = vpop.permute.xlu0 %507
    %511 = vrot.lane.b32.xlu0 %v471, 24
    %v512 = vpop.permute.xlu0 %511
    %515 = vrot.lane.b32.xlu0 %v473, 28
    %v516 = vpop.permute.xlu0 %515
    %519 = vrot.lane.b32.xlu0 %v475, 32
    %v520 = vpop.permute.xlu0 %519
    %523 = vrot.lane.b32.xlu0 %v477, 36
    %v524 = vpop.permute.xlu0 %523
    %527 = vrot.lane.b32.xlu0 %v479, 40
    %v528 = vpop.permute.xlu0 %527
    %531 = vrot.lane.b32.xlu0 %v481, 44
    %v532 = vpop.permute.xlu0 %531
    %535 = vrot.lane.b32.xlu0 %v483, 48
    %v536 = vpop.permute.xlu0 %535
    %539 = vrot.lane.b32.xlu0 %v485, 52
    %v540 = vpop.permute.xlu0 %539
    %543 = vrot.lane.b32.xlu0 %v487, 56
    %v544 = vpop.permute.xlu0 %543
    %547 = vrot.lane.b32.xlu0 %v489, 60
    %v548 = vpop.permute.xlu0 %547
    %v550 = vsel %vm107, %v459, %v492
    %v551 = vsel %vm109, %v550, %v496
    %v552 = vsel %vm111, %v551, %v500
    %v553 = vsel %vm113, %v552, %v504
    %v554 = vsel %vm115, %v553, %v508
    %v555 = vsel %vm117, %v554, %v512
    %v556 = vsel %vm119, %v555, %v516
    %v557 = vsel %vm121, %v556, %v520
    %v558 = vsel %vm123, %v557, %v524
    %v559 = vsel %vm125, %v558, %v528
    %v560 = vsel %vm127, %v559, %v532
    %v561 = vsel %vm129, %v560, %v536
    %v562 = vsel %vm131, %v561, %v540
    %v563 = vsel %vm133, %v562, %v544
    %v564 = vsel %vm135, %v563, %v548
    %s565 = scalar_lea.vmem %s0, 272
    %v566 = vld [vmem:[%s565] sm:$0xf]
    %s567 = scalar_lea.vmem %s0, 276
    %v568 = vld [vmem:[%s567] sm:$0xf]
    %s569 = scalar_lea.vmem %s0, 280
    %v570 = vld [vmem:[%s569] sm:$0xf]
    %s571 = scalar_lea.vmem %s0, 284
    %v572 = vld [vmem:[%s571] sm:$0xf]
    %s573 = scalar_lea.vmem %s0, 336
    %v574 = vld [vmem:[%s573] sm:$0xf]
    %s575 = scalar_lea.vmem %s0, 340
    %v576 = vld [vmem:[%s575] sm:$0xf]
    %s577 = scalar_lea.vmem %s0, 344
    %v578 = vld [vmem:[%s577] sm:$0xf]
    %s579 = scalar_lea.vmem %s0, 348
    %v580 = vld [vmem:[%s579] sm:$0xf]
    %s581 = scalar_lea.vmem %s0, 400
    %v582 = vld [vmem:[%s581] sm:$0xf]
    %s583 = scalar_lea.vmem %s0, 404
    %v584 = vld [vmem:[%s583] sm:$0xf]
    %s585 = scalar_lea.vmem %s0, 408
    %v586 = vld [vmem:[%s585] sm:$0xf]
    %s587 = scalar_lea.vmem %s0, 412
    %v588 = vld [vmem:[%s587] sm:$0xf]
    %s589 = scalar_lea.vmem %s0, 464
    %v590 = vld [vmem:[%s589] sm:$0xf]
    %s591 = scalar_lea.vmem %s0, 468
    %v592 = vld [vmem:[%s591] sm:$0xf]
    %s593 = scalar_lea.vmem %s0, 472
    %v594 = vld [vmem:[%s593] sm:$0xf]
    %s595 = scalar_lea.vmem %s0, 476
    %v596 = vld [vmem:[%s595] sm:$0xf]
    %598 = vrot.lane.b32.xlu0 %v568, 4
    %v599 = vpop.permute.xlu0 %598
    %602 = vrot.lane.b32.xlu0 %v570, 8
    %v603 = vpop.permute.xlu0 %602
    %606 = vrot.lane.b32.xlu0 %v572, 12
    %v607 = vpop.permute.xlu0 %606
    %610 = vrot.lane.b32.xlu0 %v574, 16
    %v611 = vpop.permute.xlu0 %610
    %614 = vrot.lane.b32.xlu0 %v576, 20
    %v615 = vpop.permute.xlu0 %614
    %618 = vrot.lane.b32.xlu0 %v578, 24
    %v619 = vpop.permute.xlu0 %618
    %622 = vrot.lane.b32.xlu0 %v580, 28
    %v623 = vpop.permute.xlu0 %622
    %626 = vrot.lane.b32.xlu0 %v582, 32
    %v627 = vpop.permute.xlu0 %626
    %630 = vrot.lane.b32.xlu0 %v584, 36
    %v631 = vpop.permute.xlu0 %630
    %634 = vrot.lane.b32.xlu0 %v586, 40
    %v635 = vpop.permute.xlu0 %634
    %638 = vrot.lane.b32.xlu0 %v588, 44
    %v639 = vpop.permute.xlu0 %638
    %642 = vrot.lane.b32.xlu0 %v590, 48
    %v643 = vpop.permute.xlu0 %642
    %646 = vrot.lane.b32.xlu0 %v592, 52
    %v647 = vpop.permute.xlu0 %646
    %650 = vrot.lane.b32.xlu0 %v594, 56
    %v651 = vpop.permute.xlu0 %650
    %654 = vrot.lane.b32.xlu0 %v596, 60
    %v655 = vpop.permute.xlu0 %654
    %v657 = vsel %vm107, %v566, %v599
    %v658 = vsel %vm109, %v657, %v603
    %v659 = vsel %vm111, %v658, %v607
    %v660 = vsel %vm113, %v659, %v611
    %v661 = vsel %vm115, %v660, %v615
    %v662 = vsel %vm117, %v661, %v619
    %v663 = vsel %vm119, %v662, %v623
    %v664 = vsel %vm121, %v663, %v627
    %v665 = vsel %vm123, %v664, %v631
    %v666 = vsel %vm125, %v665, %v635
    %v667 = vsel %vm127, %v666, %v639
    %v668 = vsel %vm129, %v667, %v643
    %v669 = vsel %vm131, %v668, %v647
    %v670 = vsel %vm133, %v669, %v651
    %v671 = vsel %vm135, %v670, %v655
    %s672 = scalar_lea.vmem %s0, 288
    %v673 = vld [vmem:[%s672] sm:$0xf]
    %s674 = scalar_lea.vmem %s0, 292
    %v675 = vld [vmem:[%s674] sm:$0xf]
    %s676 = scalar_lea.vmem %s0, 296
    %v677 = vld [vmem:[%s676] sm:$0xf]
    %s678 = scalar_lea.vmem %s0, 300
    %v679 = vld [vmem:[%s678] sm:$0xf]
    %s680 = scalar_lea.vmem %s0, 352
    %v681 = vld [vmem:[%s680] sm:$0xf]
    %s682 = scalar_lea.vmem %s0, 356
    %v683 = vld [vmem:[%s682] sm:$0xf]
    %s684 = scalar_lea.vmem %s0, 360
    %v685 = vld [vmem:[%s684] sm:$0xf]
    %s686 = scalar_lea.vmem %s0, 364
    %v687 = vld [vmem:[%s686] sm:$0xf]
    %s688 = scalar_lea.vmem %s0, 416
    %v689 = vld [vmem:[%s688] sm:$0xf]
    %s690 = scalar_lea.vmem %s0, 420
    %v691 = vld [vmem:[%s690] sm:$0xf]
    %s692 = scalar_lea.vmem %s0, 424
    %v693 = vld [vmem:[%s692] sm:$0xf]
    %s694 = scalar_lea.vmem %s0, 428
    %v695 = vld [vmem:[%s694] sm:$0xf]
    %s696 = scalar_lea.vmem %s0, 480
    %v697 = vld [vmem:[%s696] sm:$0xf]
    %s698 = scalar_lea.vmem %s0, 484
    %v699 = vld [vmem:[%s698] sm:$0xf]
    %s700 = scalar_lea.vmem %s0, 488
    %v701 = vld [vmem:[%s700] sm:$0xf]
    %s702 = scalar_lea.vmem %s0, 492
    %v703 = vld [vmem:[%s702] sm:$0xf]
    %705 = vrot.lane.b32.xlu0 %v675, 4
    %v706 = vpop.permute.xlu0 %705
    %709 = vrot.lane.b32.xlu0 %v677, 8
    %v710 = vpop.permute.xlu0 %709
    %713 = vrot.lane.b32.xlu0 %v679, 12
    %v714 = vpop.permute.xlu0 %713
    %717 = vrot.lane.b32.xlu0 %v681, 16
    %v718 = vpop.permute.xlu0 %717
    %721 = vrot.lane.b32.xlu0 %v683, 20
    %v722 = vpop.permute.xlu0 %721
    %725 = vrot.lane.b32.xlu0 %v685, 24
    %v726 = vpop.permute.xlu0 %725
    %729 = vrot.lane.b32.xlu0 %v687, 28
    %v730 = vpop.permute.xlu0 %729
    %733 = vrot.lane.b32.xlu0 %v689, 32
    %v734 = vpop.permute.xlu0 %733
    %737 = vrot.lane.b32.xlu0 %v691, 36
    %v738 = vpop.permute.xlu0 %737
    %741 = vrot.lane.b32.xlu0 %v693, 40
    %v742 = vpop.permute.xlu0 %741
    %745 = vrot.lane.b32.xlu0 %v695, 44
    %v746 = vpop.permute.xlu0 %745
    %749 = vrot.lane.b32.xlu0 %v697, 48
    %v750 = vpop.permute.xlu0 %749
    %753 = vrot.lane.b32.xlu0 %v699, 52
    %v754 = vpop.permute.xlu0 %753
    %757 = vrot.lane.b32.xlu0 %v701, 56
    %v758 = vpop.permute.xlu0 %757
    %761 = vrot.lane.b32.xlu0 %v703, 60
    %v762 = vpop.permute.xlu0 %761
    %v764 = vsel %vm107, %v673, %v706
    %v765 = vsel %vm109, %v764, %v710
    %v766 = vsel %vm111, %v765, %v714
    %v767 = vsel %vm113, %v766, %v718
    %v768 = vsel %vm115, %v767, %v722
    %v769 = vsel %vm117, %v768, %v726
    %v770 = vsel %vm119, %v769, %v730
    %v771 = vsel %vm121, %v770, %v734
    %v772 = vsel %vm123, %v771, %v738
    %v773 = vsel %vm125, %v772, %v742
    %v774 = vsel %vm127, %v773, %v746
    %v775 = vsel %vm129, %v774, %v750
    %v776 = vsel %vm131, %v775, %v754
    %v777 = vsel %vm133, %v776, %v758
    %v778 = vsel %vm135, %v777, %v762
    %s779 = scalar_lea.vmem %s0, 304
    %v780 = vld [vmem:[%s779] sm:$0xf]
    %s781 = scalar_lea.vmem %s0, 308
    %v782 = vld [vmem:[%s781] sm:$0xf]
    %s783 = scalar_lea.vmem %s0, 312
    %v784 = vld [vmem:[%s783] sm:$0xf]
    %s785 = scalar_lea.vmem %s0, 316
    %v786 = vld [vmem:[%s785] sm:$0xf]
    %s787 = scalar_lea.vmem %s0, 368
    %v788 = vld [vmem:[%s787] sm:$0xf]
    %s789 = scalar_lea.vmem %s0, 372
    %v790 = vld [vmem:[%s789] sm:$0xf]
    %s791 = scalar_lea.vmem %s0, 376
    %v792 = vld [vmem:[%s791] sm:$0xf]
    %s793 = scalar_lea.vmem %s0, 380
    %v794 = vld [vmem:[%s793] sm:$0xf]
    %s795 = scalar_lea.vmem %s0, 432
    %v796 = vld [vmem:[%s795] sm:$0xf]
    %s797 = scalar_lea.vmem %s0, 436
    %v798 = vld [vmem:[%s797] sm:$0xf]
    %s799 = scalar_lea.vmem %s0, 440
    %v800 = vld [vmem:[%s799] sm:$0xf]
    %s801 = scalar_lea.vmem %s0, 444
    %v802 = vld [vmem:[%s801] sm:$0xf]
    %s803 = scalar_lea.vmem %s0, 496
    %v804 = vld [vmem:[%s803] sm:$0xf]
    %s805 = scalar_lea.vmem %s0, 500
    %v806 = vld [vmem:[%s805] sm:$0xf]
    %s807 = scalar_lea.vmem %s0, 504
    %v808 = vld [vmem:[%s807] sm:$0xf]
    %s809 = scalar_lea.vmem %s0, 508
    %v810 = vld [vmem:[%s809] sm:$0xf]
    %812 = vrot.lane.b32.xlu0 %v782, 4
    %v813 = vpop.permute.xlu0 %812
    %816 = vrot.lane.b32.xlu0 %v784, 8
    %v817 = vpop.permute.xlu0 %816
    %820 = vrot.lane.b32.xlu0 %v786, 12
    %v821 = vpop.permute.xlu0 %820
    %824 = vrot.lane.b32.xlu0 %v788, 16
    %v825 = vpop.permute.xlu0 %824
    %828 = vrot.lane.b32.xlu0 %v790, 20
    %v829 = vpop.permute.xlu0 %828
    %832 = vrot.lane.b32.xlu0 %v792, 24
    %v833 = vpop.permute.xlu0 %832
    %836 = vrot.lane.b32.xlu0 %v794, 28
    %v837 = vpop.permute.xlu0 %836
    %840 = vrot.lane.b32.xlu0 %v796, 32
    %v841 = vpop.permute.xlu0 %840
    %844 = vrot.lane.b32.xlu0 %v798, 36
    %v845 = vpop.permute.xlu0 %844
    %848 = vrot.lane.b32.xlu0 %v800, 40
    %v849 = vpop.permute.xlu0 %848
    %852 = vrot.lane.b32.xlu0 %v802, 44
    %v853 = vpop.permute.xlu0 %852
    %856 = vrot.lane.b32.xlu0 %v804, 48
    %v857 = vpop.permute.xlu0 %856
    %860 = vrot.lane.b32.xlu0 %v806, 52
    %v861 = vpop.permute.xlu0 %860
    %864 = vrot.lane.b32.xlu0 %v808, 56
    %v865 = vpop.permute.xlu0 %864
    %868 = vrot.lane.b32.xlu0 %v810, 60
    %v869 = vpop.permute.xlu0 %868
    %v871 = vsel %vm107, %v780, %v813
    %v872 = vsel %vm109, %v871, %v817
    %v873 = vsel %vm111, %v872, %v821
    %v874 = vsel %vm113, %v873, %v825
    %v875 = vsel %vm115, %v874, %v829
    %v876 = vsel %vm117, %v875, %v833
    %v877 = vsel %vm119, %v876, %v837
    %v878 = vsel %vm121, %v877, %v841
    %v879 = vsel %vm123, %v878, %v845
    %v880 = vsel %vm125, %v879, %v849
    %v881 = vsel %vm127, %v880, %v853
    %v882 = vsel %vm129, %v881, %v857
    %v883 = vsel %vm131, %v882, %v861
    %v884 = vsel %vm133, %v883, %v865
    %v885 = vsel %vm135, %v884, %v869
    %v887 = vrot.slane %v243, 4
    %v890 = vrot.slane %v457, 4
    %v893 = vrot.slane %v671, 4
    %v896 = vrot.slane %v885, 4
    %vm898 = vcmask 1043456
    %v899 = vsel %vm898, %v136, %v887
    %v900 = vsel %vm898, %v350, %v890
    %v901 = vsel %vm898, %v564, %v893
    %v902 = vsel %vm898, %v778, %v896
    %v903 = vpack.c.bf16 %v900, %v899
    %v904 = vpack.c.bf16 %v902, %v901
    %v905 = vld [vmem:[%s1] sm:$0xf]
    %v906 = vld [vmem:[%s1 + $0x4] sm:$0xf]
    %v907 = vld [vmem:[%s1 + $0x8] sm:$0xf]
    %v908 = vld [vmem:[%s1 + $0xc] sm:$0xf]
    %v909 = vld [vmem:[%s1 + $0x10] sm:$0xf]
    %v910 = vld [vmem:[%s1 + $0x14] sm:$0xf]
    %v911 = vld [vmem:[%s1 + $0x18] sm:$0xf]
    %v912 = vld [vmem:[%s1 + $0x1c] sm:$0xf]
    %v913 = vld [vmem:[%s2] sm:$0x1]
    %v915 = vlaneseq
    %v916 = vshrl.u32 %v915, 7
    %v917 = vsub.s32 0, %v916
    %v918 = vrot.slane %v913, %v917
    %v928 = vunpack.c.l.b16 %v905
    %v929 = vunpack.c.l.b16 %v906
    %v930 = vunpack.c.l.b16 %v907
    %v931 = vunpack.c.l.b16 %v908
    %v932 = vunpack.c.l.b16 %v909
    %v933 = vunpack.c.l.b16 %v910
    %v934 = vunpack.c.l.b16 %v911
    %v935 = vunpack.c.l.b16 %v912
    %v936 = vpack.c.b16 %v929, %v928
    %v937 = vpack.c.b16 %v931, %v930
    %v938 = vpack.c.b16 %v933, %v932
    %v939 = vpack.c.b16 %v935, %v934
    %vm944 = vcmask 523264
    %v946 = vsel %vm944, %v903, 0
    %v949 = vsel %vm944, %v904, 0
    %951 = vmatprep.subr.bf16.mxu0 0
    %952 = vmatpush1.bf16.msra.mxu0 %v936
    %953 = vmatprep.subr.bf16.mxu0 0
    %954 = vmatpush1.bf16.msra.mxu0 %v937
    %955 = vmatprep.subr.bf16.mxu0 0
    %956 = vmatpush1.bf16.msra.mxu0 %v938
    %957 = vmatprep.subr.bf16.mxu0 0
    %958 = vmatpush1.bf16.msra.mxu0 %v939
    %959 = vmatprep.subr.bf16.mxu0 0
    %960 = vmatpush1.bf16.msra.mxu0 0
    %961 = vmatprep.subr.bf16.mxu0 0
    %962 = vmatpush1.bf16.msra.mxu0 0
    %963 = vmatprep.subr.bf16.mxu0 0
    %964 = vmatpush1.bf16.msra.mxu0 0
    %965 = vmatprep.subr.bf16.mxu0 0
    %966 = vmatpush1.bf16.msra.mxu0 0
    %967 = vmatprep.subr.bf16.mxu0 0
    %968 = vmatpush1.bf16.msra.mxu0 0
    %969 = vmatprep.subr.bf16.mxu0 0
    %970 = vmatpush1.bf16.msra.mxu0 0
    %971 = vmatprep.subr.bf16.mxu0 0
    %972 = vmatpush1.bf16.msra.mxu0 0
    %973 = vmatprep.subr.bf16.mxu0 0
    %974 = vmatpush1.bf16.msra.mxu0 0
    %975 = vmatprep.subr.bf16.mxu0 0
    %976 = vmatpush1.bf16.msra.mxu0 0
    %977 = vmatprep.subr.bf16.mxu0 0
    %978 = vmatpush1.bf16.msra.mxu0 0
    %979 = vmatprep.subr.bf16.mxu0 0
    %980 = vmatpush1.bf16.msra.mxu0 0
    %981 = vmatprep.subr.bf16.mxu0 0
    %982 = vmatpush1.bf16.msra.mxu0 0
    %983 = vmatprep.mubr.bf16.mxu0 0
    %984 = vmatmul.mubr.bf16.gmra.mrb[0].mxu0 %v946
    %v985 = vpop.f32.mrb[0].mxu0
    %v986 = vadd.f32 %v918, %v985
    %v987 = vpop.f32.mrb[0].mxu0
    %v988 = vpop.f32.mrb[0].mxu0
    %v989 = vadd.f32 %v918, %v988
    %v990 = vpop.f32.mrb[0].mxu0
    %991 = vmatprep.mubr.bf16.mxu0 0
    %992 = vmatmul.mubr.bf16.gmra.mrb[0].mxu0 %v949
    %v993 = vpop.f32.mrb[0].mxu0
    %v994 = vadd.f32 %v918, %v993
    %v995 = vpop.f32.mrb[0].mxu0
    %v996 = vpop.f32.mrb[0].mxu0
    %v997 = vadd.f32 %v918, %v996
    %v998 = vpop.f32.mrb[0].mxu0
    %999 = vdwg.mxu0
    %v1000 = vpack.c.bf16 %v989, %v986
    %v1001 = vpack.c.bf16 %v997, %v994
    %v1004 = vunpack.c.l.b16 %v1000
    %v1005 = vunpack.c.h.b16 %v1000
    %v1006 = vunpack.c.l.b16 %v1001
    %v1007 = vunpack.c.h.b16 %v1001
    %v1008 = vpack.c.b16 %v1004, %v1004
    %v1009 = vpack.c.b16 %v1005, %v1005
    %v1010 = vpack.c.b16 %v1006, %v1006
    %v1011 = vpack.c.b16 %v1007, %v1007
    %1016 = vst [vmem:[#allocation2] sm:$0xf] %v1008
    %1017 = vst [vmem:[#allocation2 + $0x4] sm:$0xf] %v1009
    %1018 = vst [vmem:[#allocation2 + $0x8] sm:$0xf] %v1010
    %1019 = vst [vmem:[#allocation2 + $0xc] sm:$0xf] %v1011
    // Predicated region
    $region14: #{patch_embedding.1} parent=1 // pred_check
      _
    $region15: #{patch_embedding.1} parent=1 // pred_check_branch
      %1021 = sbr.rel (0) target = $region17
    $region16: #{patch_embedding.1} parent=1 // pred_region
      %s1023 = ssub.s32 256, 256
      %1024 = vsyncadd [#allocation3], %s1023
      %s1025 = sshll.u32 [#allocation2], 4
      %s1026 = int_to_ptr.vmem [resolvable:$true] %s1025
      %1031 = dma.vmem_to_hbm [thread:$0]  %s1026, 256, %s3, [#allocation3], 64, 64, 4
    $region17: #{patch_embedding.1} parent=1 // pred_fallthru
      _
    // Predicated region
    $region18: #{patch_embedding.1} parent=1 // pred_check
      _
    $region19: #{patch_embedding.1} parent=1 // pred_check_branch
      %1033 = sbr.rel (0) target = $region21
    $region20: #{patch_embedding.1} parent=1 // pred_region
      %1034 = dma.done [#allocation3], 256
    $region21: #{patch_embedding.1} parent=1 // pred_fallthru
      _
    %1035 = vsyncpa [#allocation3], 1

</llo_original>
